<compile_context>
chip_gen: v7x
topology: tpu7x:2x2x1
jax: 0.10.0
libtpu: 0.0.40
codegen_flags: <defaults>
</compile_context>

<pallas_src>
import functools

import jax
import jax.numpy as jnp
from jax.experimental import pallas as pl
from jax.experimental.pallas import tpu as pltpu


def _attention_kernel(x_ref, wq_ref, wk_ref, wv_ref, wo_ref, bo_ref, o_ref,
                      *, heads):
    # x_ref : (bt, n, dim)             current batch block
    # wq/wk/wv_ref : (heads, dim, dh)  bf16, head-major; softmax scale folded into wq
    # wo_ref: (heads, dh, dim)         bf16 output-projection weight, head-major
    # bo_ref: (1, dim)                 f32 output bias
    bt, n, dim = x_ref.shape
    dh = wq_ref.shape[-1]
    rows = bt * n

    # bf16 operands for every MXU matmul; accumulate in f32.
    x = x_ref[...].reshape(rows, dim).astype(jnp.bfloat16)          # (rows, dim)

    acc = jnp.zeros((rows, dim), jnp.float32)
    for h in range(heads):                                           # heads: small & static
        # Per-head projections via free leading-axis weight indexing (no lane slicing).
        q = jnp.dot(x, wq_ref[h], preferred_element_type=jnp.float32)
        k = jnp.dot(x, wk_ref[h], preferred_element_type=jnp.float32)
        v = jnp.dot(x, wv_ref[h], preferred_element_type=jnp.float32)
        q = q.reshape(bt, n, dh).astype(jnp.bfloat16)
        k = k.reshape(bt, n, dh).astype(jnp.bfloat16)
        v = v.reshape(bt, n, dh).astype(jnp.bfloat16)

        # Scores: contract last dims directly (no .T); scale already in wq.
        s = jnp.einsum('bid,bjd->bij', q, k,
                       preferred_element_type=jnp.float32)          # (bt, n, n) f32
        s = s - jnp.max(s, axis=-1, keepdims=True)                   # stable softmax
        p = jnp.exp(s)
        p = p * pl.reciprocal(jnp.sum(p, axis=-1, keepdims=True), approx=True)

        o_h = jnp.einsum('bij,bjd->bid', p.astype(jnp.bfloat16), v,
                         preferred_element_type=jnp.float32)         # (bt, n, dh)

        # Output projection accumulated per head (replaces lane-axis concat).
        acc = acc + jnp.dot(o_h.reshape(rows, dh).astype(jnp.bfloat16), wo_ref[h],
                            preferred_element_type=jnp.float32)      # (rows, dim)

    y = acc + bo_ref[...]                                            # bias broadcast
    o_ref[...] = y.reshape(bt, n, dim).astype(o_ref.dtype)


def attention_forward(x, w_qkv, w_out, b_out, *, heads, dim_head,
                      block_batch=None):
    """Pallas equivalent of Attention.forward (eval mode, dropout p=0).

    x:     (b, n, dim)
    w_qkv: (dim, 3*inner)  to_qkv weight, already transposed vs torch (weight.T)
    w_out: (inner, dim)    to_out[0] weight, already transposed
    b_out: (1, dim)        to_out[0] bias
    Assumes project_out=True (the default heads>1 config of the module).
    """
    b, n, dim = x.shape
    inner = heads * dim_head
    assert w_qkv.shape == (dim, 3 * inner)
    assert w_out.shape == (inner, dim)
    scale = float(dim_head) ** -0.5

    bt = b if block_batch is None else block_batch
    assert b % bt == 0, (b, bt)

    # Host-side weight prep: head-major layout, bf16 storage, scale folded into Q.
    # w_qkv columns are laid out [q | k | v] x [head] x [dim_head].
    wqkv = w_qkv.reshape(dim, 3, heads, dim_head).transpose(1, 2, 0, 3)  # (3,h,dim,dh)
    w_q = (wqkv[0] * scale).astype(jnp.bfloat16)
    w_k = wqkv[1].astype(jnp.bfloat16)
    w_v = wqkv[2].astype(jnp.bfloat16)
    w_o = w_out.reshape(heads, dim_head, dim).astype(jnp.bfloat16)
    b_o = b_out.reshape(1, dim).astype(jnp.float32)

    # VMEM budget: x/out blocks (double-buffered), bf16 weights (x2 buffers),
    # f32 q/k/v + accumulator + per-head (n, n) scores/probs.
    itemsize = x.dtype.itemsize
    est = (4 * bt * n * dim * itemsize
           + 4 * 2 * (3 * heads * dim * dim_head + inner * dim + dim)
           + 4 * bt * n * (3 * dim_head + 2 * dim)
           + 8 * bt * n * n)
    vmem_limit = int(min(max(2 * est, 32 * 1024 * 1024), 48 * 1024 * 1024))

    kernel = functools.partial(_attention_kernel, heads=heads)

    # TODO(synk): for long sequences (n ~> 1k, especially v7x's 64 MiB VMEM),
    # tile the query and KV axes flash-style (online-softmax scratch) instead
    # of holding full per-head (n, n) scores; that needs the qkv projection
    # split out of this fusion to avoid recomputing it per tile.
    # TODO(synk): single-buffer the constant weight blocks
    # (pipeline_mode=pl.Buffered(1)) once verified on the target JAX version.
    return pl.pallas_call(
        kernel,
        out_shape=jax.ShapeDtypeStruct((b, n, dim), x.dtype),
        grid=(b // bt,),
        in_specs=[
            pl.BlockSpec((bt, n, dim), lambda i: (i, 0, 0)),             # x block
            pl.BlockSpec((heads, dim, dim_head), lambda i: (0, 0, 0)),   # w_q resident
            pl.BlockSpec((heads, dim, dim_head), lambda i: (0, 0, 0)),   # w_k resident
            pl.BlockSpec((heads, dim, dim_head), lambda i: (0, 0, 0)),   # w_v resident
            pl.BlockSpec((heads, dim_head, dim), lambda i: (0, 0, 0)),   # w_o resident
            pl.BlockSpec((1, dim), lambda i: (0, 0)),                    # bias resident
        ],
        out_specs=pl.BlockSpec((bt, n, dim), lambda i: (i, 0, 0)),
        compiler_params=pltpu.CompilerParams(
            dimension_semantics=("parallel",),        # batch blocks across TCs (v7x)
            vmem_limit_bytes=vmem_limit),
    )(x, w_q, w_k, w_v, w_o, b_o)


def _attention_ref(x, w_qkv, w_out, b_out, *, heads, dim_head):
    """Pure-JAX (f32) reference matching the PyTorch module."""
    b, n, dim = x.shape
    inner = heads * dim_head
    scale = float(dim_head) ** -0.5
    qkv = x @ w_qkv                                                  # (b, n, 3*inner)
    q, k, v = jnp.split(qkv, 3, axis=-1)

    def to_heads(t):                                                 # b n (h d) -> b h n d
        return t.reshape(b, n, heads, dim_head).transpose(0, 2, 1, 3)

    q, k, v = map(to_heads, (q, k, v))
    dots = jnp.einsum('bhid,bhjd->bhij', q, k) * scale
    attn = jax.nn.softmax(dots, axis=-1)
    out = jnp.einsum('bhij,bhjd->bhid', attn, v)
    out = out.transpose(0, 2, 1, 3).reshape(b, n, inner)             # b h n d -> b n (h d)
    return out @ w_out + b_out


if __name__ == "__main__":
    key = jax.random.PRNGKey(0)
    kx, kqkv, kout, kb = jax.random.split(key, 4)

    # Small shapes consistent with the module: batch=2, seq=8, dim=32,
    # heads=4, dim_head=8 -> inner_dim=32, project_out=True.
    B, N, DIM = 2, 8, 32
    HEADS, DIM_HEAD = 4, 8
    INNER = HEADS * DIM_HEAD

    x = jax.random.normal(kx, (B, N, DIM), dtype=jnp.float32)
    # Weights stored pre-transposed relative to torch's nn.Linear (out, in).
    w_qkv = jax.random.normal(kqkv, (DIM, 3 * INNER), dtype=jnp.float32) * 0.1
    w_out = jax.random.normal(kout, (INNER, DIM), dtype=jnp.float32) * 0.1
    b_out = jax.random.normal(kb, (1, DIM), dtype=jnp.float32) * 0.1

    out = attention_forward(x, w_qkv, w_out, b_out, heads=HEADS, dim_head=DIM_HEAD)
    out = jax.block_until_ready(out)

    ref = _attention_ref(x, w_qkv, w_out, b_out, heads=HEADS, dim_head=DIM_HEAD)
    assert out.shape == (B, N, DIM) and out.dtype == x.dtype
    max_err = float(jnp.max(jnp.abs(out - ref)))
    # bf16 MXU operands with f32 accumulation -> relaxed tolerance vs pure f32.
    assert jnp.allclose(out, ref, rtol=2e-2, atol=2e-2), max_err
    print("KERNEL_OK")
</pallas_src>

<mosaic_0001>
module attributes {stable_mosaic.version = 11 : i64} {
  func.func @_attention_kernel(%arg0: i32, %arg1: memref<2x8x32xf32, #tpu.memory_space<vmem>>, %arg2: memref<4x32x8xbf16, #tpu.memory_space<vmem>>, %arg3: memref<4x32x8xbf16, #tpu.memory_space<vmem>>, %arg4: memref<4x32x8xbf16, #tpu.memory_space<vmem>>, %arg5: memref<4x8x32xbf16, #tpu.memory_space<vmem>>, %arg6: memref<1x32xf32, #tpu.memory_space<vmem>>, %arg7: memref<2x8x32xf32, #tpu.memory_space<vmem>>) attributes {dimension_semantics = [#tpu.dimension_semantics<parallel>], iteration_bounds = array<i64: 1>, scalar_prefetch = 0 : i64, scratch_operands = 0 : i64, tpu.core_type = #tpu.core_type<tc>, window_params = [{transform_indices = @transform_0, window_bounds = array<i64: 2, 8, 32>}, {pipeline_mode = #tpu.pipeline_mode<synchronous>, transform_indices = @transform_1, window_bounds = array<i64: 4, 32, 8>}, {pipeline_mode = #tpu.pipeline_mode<synchronous>, transform_indices = @transform_2, window_bounds = array<i64: 4, 32, 8>}, {pipeline_mode = #tpu.pipeline_mode<synchronous>, transform_indices = @transform_3, window_bounds = array<i64: 4, 32, 8>}, {pipeline_mode = #tpu.pipeline_mode<synchronous>, transform_indices = @transform_4, window_bounds = array<i64: 4, 8, 32>}, {pipeline_mode = #tpu.pipeline_mode<synchronous>, transform_indices = @transform_5, window_bounds = array<i64: 1, 32>}, {transform_indices = @transform_6, window_bounds = array<i64: 2, 8, 32>}]} {
    %c0 = arith.constant 0 : index
    %c0_0 = arith.constant 0 : index
    %c0_1 = arith.constant 0 : index
    %0 = vector.load %arg1[%c0, %c0_0, %c0_1] : memref<2x8x32xf32, #tpu.memory_space<vmem>>, vector<2x8x32xf32>
    %1 = vector.shape_cast %0 : vector<2x8x32xf32> to vector<16x32xf32>
    %2 = arith.truncf %1 : vector<16x32xf32> to vector<16x32xbf16>
    %cst = arith.constant 0.000000e+00 : f32
    %3 = vector.broadcast %cst : f32 to vector<16x32xf32>
    %c0_2 = arith.constant 0 : index
    %c0_3 = arith.constant 0 : index
    %c0_4 = arith.constant 0 : index
    %4 = vector.load %arg2[%c0_2, %c0_3, %c0_4] : memref<4x32x8xbf16, #tpu.memory_space<vmem>>, vector<1x32x8xbf16>
    %5 = vector.shape_cast %4 : vector<1x32x8xbf16> to vector<32x8xbf16>
    %cst_5 = arith.constant dense<0.000000e+00> : vector<16x8xf32>
    %6 = tpu.matmul %2, %5, %cst_5 {dimension_numbers = #tpu.dot_dimension_numbers<[1], [0], [0], [1], [0, 0, 1, 1], [], []>} : vector<16x32xbf16>, vector<32x8xbf16>, vector<16x8xf32> -> vector<16x8xf32>
    %c0_6 = arith.constant 0 : index
    %c0_7 = arith.constant 0 : index
    %c0_8 = arith.constant 0 : index
    %7 = vector.load %arg3[%c0_6, %c0_7, %c0_8] : memref<4x32x8xbf16, #tpu.memory_space<vmem>>, vector<1x32x8xbf16>
    %8 = vector.shape_cast %7 : vector<1x32x8xbf16> to vector<32x8xbf16>
    %cst_9 = arith.constant dense<0.000000e+00> : vector<16x8xf32>
    %9 = tpu.matmul %2, %8, %cst_9 {dimension_numbers = #tpu.dot_dimension_numbers<[1], [0], [0], [1], [0, 0, 1, 1], [], []>} : vector<16x32xbf16>, vector<32x8xbf16>, vector<16x8xf32> -> vector<16x8xf32>
    %c0_10 = arith.constant 0 : index
    %c0_11 = arith.constant 0 : index
    %c0_12 = arith.constant 0 : index
    %10 = vector.load %arg4[%c0_10, %c0_11, %c0_12] : memref<4x32x8xbf16, #tpu.memory_space<vmem>>, vector<1x32x8xbf16>
    %11 = vector.shape_cast %10 : vector<1x32x8xbf16> to vector<32x8xbf16>
    %cst_13 = arith.constant dense<0.000000e+00> : vector<16x8xf32>
    %12 = tpu.matmul %2, %11, %cst_13 {dimension_numbers = #tpu.dot_dimension_numbers<[1], [0], [0], [1], [0, 0, 1, 1], [], []>} : vector<16x32xbf16>, vector<32x8xbf16>, vector<16x8xf32> -> vector<16x8xf32>
    %13 = vector.shape_cast %6 : vector<16x8xf32> to vector<2x8x8xf32>
    %14 = arith.truncf %13 : vector<2x8x8xf32> to vector<2x8x8xbf16>
    %15 = vector.shape_cast %9 : vector<16x8xf32> to vector<2x8x8xf32>
    %16 = arith.truncf %15 : vector<2x8x8xf32> to vector<2x8x8xbf16>
    %17 = vector.shape_cast %12 : vector<16x8xf32> to vector<2x8x8xf32>
    %18 = arith.truncf %17 : vector<2x8x8xf32> to vector<2x8x8xbf16>
    "tpu.trace_start"() <{level = 10 : i32, message = "bid,bjd->bij"}> : () -> ()
    %cst_14 = arith.constant dense<0.000000e+00> : vector<2x8x8xf32>
    %19 = tpu.matmul %14, %16, %cst_14 {dimension_numbers = #tpu.dot_dimension_numbers<[2], [2], [1], [1], [0, 0, 0, 1, 1, 1], [0], [0]>} : vector<2x8x8xbf16>, vector<2x8x8xbf16>, vector<2x8x8xf32> -> vector<2x8x8xf32>
    "tpu.trace_stop"() : () -> ()
    %cst_15 = arith.constant dense<0xFF800000> : vector<2x8xf32>
    %20 = vector.multi_reduction <maximumf>, %19, %cst_15 [2] : vector<2x8x8xf32> to vector<2x8xf32>
    %21 = vector.shape_cast %20 : vector<2x8xf32> to vector<2x8x1xf32>
    %22 = vector.broadcast %21 : vector<2x8x1xf32> to vector<2x8x8xf32>
    %23 = arith.subf %19, %22 : vector<2x8x8xf32>
    %24 = math.exp %23 : vector<2x8x8xf32>
    %cst_16 = arith.constant dense<0.000000e+00> : vector<2x8xf32>
    %25 = vector.multi_reduction <add>, %24, %cst_16 [2] : vector<2x8x8xf32> to vector<2x8xf32>
    %26 = vector.shape_cast %25 : vector<2x8xf32> to vector<2x8x1xf32>
    %27 = tpu.reciprocal %26 {approx = true} : vector<2x8x1xf32> -> vector<2x8x1xf32>
    %28 = vector.broadcast %27 : vector<2x8x1xf32> to vector<2x8x8xf32>
    %29 = arith.mulf %24, %28 : vector<2x8x8xf32>
    %30 = arith.truncf %29 : vector<2x8x8xf32> to vector<2x8x8xbf16>
    "tpu.trace_start"() <{level = 10 : i32, message = "bij,bjd->bid"}> : () -> ()
    %cst_17 = arith.constant dense<0.000000e+00> : vector<2x8x8xf32>
    %31 = tpu.matmul %30, %18, %cst_17 {dimension_numbers = #tpu.dot_dimension_numbers<[2], [1], [1], [2], [0, 0, 0, 1, 1, 2], [0], [0]>} : vector<2x8x8xbf16>, vector<2x8x8xbf16>, vector<2x8x8xf32> -> vector<2x8x8xf32>
    "tpu.trace_stop"() : () -> ()
    %32 = vector.shape_cast %31 : vector<2x8x8xf32> to vector<16x8xf32>
    %33 = arith.truncf %32 : vector<16x8xf32> to vector<16x8xbf16>
    %c0_18 = arith.constant 0 : index
    %c0_19 = arith.constant 0 : index
    %c0_20 = arith.constant 0 : index
    %34 = vector.load %arg5[%c0_18, %c0_19, %c0_20] : memref<4x8x32xbf16, #tpu.memory_space<vmem>>, vector<1x8x32xbf16>
    %35 = vector.shape_cast %34 : vector<1x8x32xbf16> to vector<8x32xbf16>
    %cst_21 = arith.constant dense<0.000000e+00> : vector<16x32xf32>
    %36 = tpu.matmul %33, %35, %cst_21 {dimension_numbers = #tpu.dot_dimension_numbers<[1], [0], [0], [1], [0, 0, 1, 1], [], []>} : vector<16x8xbf16>, vector<8x32xbf16>, vector<16x32xf32> -> vector<16x32xf32>
    %37 = arith.addf %3, %36 : vector<16x32xf32>
    %c1 = arith.constant 1 : index
    %c0_22 = arith.constant 0 : index
    %c0_23 = arith.constant 0 : index
    %38 = vector.load %arg2[%c1, %c0_22, %c0_23] : memref<4x32x8xbf16, #tpu.memory_space<vmem>>, vector<1x32x8xbf16>
    %39 = vector.shape_cast %38 : vector<1x32x8xbf16> to vector<32x8xbf16>
    %cst_24 = arith.constant dense<0.000000e+00> : vector<16x8xf32>
    %40 = tpu.matmul %2, %39, %cst_24 {dimension_numbers = #tpu.dot_dimension_numbers<[1], [0], [0], [1], [0, 0, 1, 1], [], []>} : vector<16x32xbf16>, vector<32x8xbf16>, vector<16x8xf32> -> vector<16x8xf32>
    %c1_25 = arith.constant 1 : index
    %c0_26 = arith.constant 0 : index
    %c0_27 = arith.constant 0 : index
    %41 = vector.load %arg3[%c1_25, %c0_26, %c0_27] : memref<4x32x8xbf16, #tpu.memory_space<vmem>>, vector<1x32x8xbf16>
    %42 = vector.shape_cast %41 : vector<1x32x8xbf16> to vector<32x8xbf16>
    %cst_28 = arith.constant dense<0.000000e+00> : vector<16x8xf32>
    %43 = tpu.matmul %2, %42, %cst_28 {dimension_numbers = #tpu.dot_dimension_numbers<[1], [0], [0], [1], [0, 0, 1, 1], [], []>} : vector<16x32xbf16>, vector<32x8xbf16>, vector<16x8xf32> -> vector<16x8xf32>
    %c1_29 = arith.constant 1 : index
    %c0_30 = arith.constant 0 : index
    %c0_31 = arith.constant 0 : index
    %44 = vector.load %arg4[%c1_29, %c0_30, %c0_31] : memref<4x32x8xbf16, #tpu.memory_space<vmem>>, vector<1x32x8xbf16>
    %45 = vector.shape_cast %44 : vector<1x32x8xbf16> to vector<32x8xbf16>
    %cst_32 = arith.constant dense<0.000000e+00> : vector<16x8xf32>
    %46 = tpu.matmul %2, %45, %cst_32 {dimension_numbers = #tpu.dot_dimension_numbers<[1], [0], [0], [1], [0, 0, 1, 1], [], []>} : vector<16x32xbf16>, vector<32x8xbf16>, vector<16x8xf32> -> vector<16x8xf32>
    %47 = vector.shape_cast %40 : vector<16x8xf32> to vector<2x8x8xf32>
    %48 = arith.truncf %47 : vector<2x8x8xf32> to vector<2x8x8xbf16>
    %49 = vector.shape_cast %43 : vector<16x8xf32> to vector<2x8x8xf32>
    %50 = arith.truncf %49 : vector<2x8x8xf32> to vector<2x8x8xbf16>
    %51 = vector.shape_cast %46 : vector<16x8xf32> to vector<2x8x8xf32>
    %52 = arith.truncf %51 : vector<2x8x8xf32> to vector<2x8x8xbf16>
    "tpu.trace_start"() <{level = 10 : i32, message = "bid,bjd->bij"}> : () -> ()
    %cst_33 = arith.constant dense<0.000000e+00> : vector<2x8x8xf32>
    %53 = tpu.matmul %48, %50, %cst_33 {dimension_numbers = #tpu.dot_dimension_numbers<[2], [2], [1], [1], [0, 0, 0, 1, 1, 1], [0], [0]>} : vector<2x8x8xbf16>, vector<2x8x8xbf16>, vector<2x8x8xf32> -> vector<2x8x8xf32>
    "tpu.trace_stop"() : () -> ()
    %cst_34 = arith.constant dense<0xFF800000> : vector<2x8xf32>
    %54 = vector.multi_reduction <maximumf>, %53, %cst_34 [2] : vector<2x8x8xf32> to vector<2x8xf32>
    %55 = vector.shape_cast %54 : vector<2x8xf32> to vector<2x8x1xf32>
    %56 = vector.broadcast %55 : vector<2x8x1xf32> to vector<2x8x8xf32>
    %57 = arith.subf %53, %56 : vector<2x8x8xf32>
    %58 = math.exp %57 : vector<2x8x8xf32>
    %cst_35 = arith.constant dense<0.000000e+00> : vector<2x8xf32>
    %59 = vector.multi_reduction <add>, %58, %cst_35 [2] : vector<2x8x8xf32> to vector<2x8xf32>
    %60 = vector.shape_cast %59 : vector<2x8xf32> to vector<2x8x1xf32>
    %61 = tpu.reciprocal %60 {approx = true} : vector<2x8x1xf32> -> vector<2x8x1xf32>
    %62 = vector.broadcast %61 : vector<2x8x1xf32> to vector<2x8x8xf32>
    %63 = arith.mulf %58, %62 : vector<2x8x8xf32>
    %64 = arith.truncf %63 : vector<2x8x8xf32> to vector<2x8x8xbf16>
    "tpu.trace_start"() <{level = 10 : i32, message = "bij,bjd->bid"}> : () -> ()
    %cst_36 = arith.constant dense<0.000000e+00> : vector<2x8x8xf32>
    %65 = tpu.matmul %64, %52, %cst_36 {dimension_numbers = #tpu.dot_dimension_numbers<[2], [1], [1], [2], [0, 0, 0, 1, 1, 2], [0], [0]>} : vector<2x8x8xbf16>, vector<2x8x8xbf16>, vector<2x8x8xf32> -> vector<2x8x8xf32>
    "tpu.trace_stop"() : () -> ()
    %66 = vector.shape_cast %65 : vector<2x8x8xf32> to vector<16x8xf32>
    %67 = arith.truncf %66 : vector<16x8xf32> to vector<16x8xbf16>
    %c1_37 = arith.constant 1 : index
    %c0_38 = arith.constant 0 : index
    %c0_39 = arith.constant 0 : index
    %68 = vector.load %arg5[%c1_37, %c0_38, %c0_39] : memref<4x8x32xbf16, #tpu.memory_space<vmem>>, vector<1x8x32xbf16>
    %69 = vector.shape_cast %68 : vector<1x8x32xbf16> to vector<8x32xbf16>
    %cst_40 = arith.constant dense<0.000000e+00> : vector<16x32xf32>
    %70 = tpu.matmul %67, %69, %cst_40 {dimension_numbers = #tpu.dot_dimension_numbers<[1], [0], [0], [1], [0, 0, 1, 1], [], []>} : vector<16x8xbf16>, vector<8x32xbf16>, vector<16x32xf32> -> vector<16x32xf32>
    %71 = arith.addf %37, %70 : vector<16x32xf32>
    %c2 = arith.constant 2 : index
    %c0_41 = arith.constant 0 : index
    %c0_42 = arith.constant 0 : index
    %72 = vector.load %arg2[%c2, %c0_41, %c0_42] : memref<4x32x8xbf16, #tpu.memory_space<vmem>>, vector<1x32x8xbf16>
    %73 = vector.shape_cast %72 : vector<1x32x8xbf16> to vector<32x8xbf16>
    %cst_43 = arith.constant dense<0.000000e+00> : vector<16x8xf32>
    %74 = tpu.matmul %2, %73, %cst_43 {dimension_numbers = #tpu.dot_dimension_numbers<[1], [0], [0], [1], [0, 0, 1, 1], [], []>} : vector<16x32xbf16>, vector<32x8xbf16>, vector<16x8xf32> -> vector<16x8xf32>
    %c2_44 = arith.constant 2 : index
    %c0_45 = arith.constant 0 : index
    %c0_46 = arith.constant 0 : index
    %75 = vector.load %arg3[%c2_44, %c0_45, %c0_46] : memref<4x32x8xbf16, #tpu.memory_space<vmem>>, vector<1x32x8xbf16>
    %76 = vector.shape_cast %75 : vector<1x32x8xbf16> to vector<32x8xbf16>
    %cst_47 = arith.constant dense<0.000000e+00> : vector<16x8xf32>
    %77 = tpu.matmul %2, %76, %cst_47 {dimension_numbers = #tpu.dot_dimension_numbers<[1], [0], [0], [1], [0, 0, 1, 1], [], []>} : vector<16x32xbf16>, vector<32x8xbf16>, vector<16x8xf32> -> vector<16x8xf32>
    %c2_48 = arith.constant 2 : index
    %c0_49 = arith.constant 0 : index
    %c0_50 = arith.constant 0 : index
    %78 = vector.load %arg4[%c2_48, %c0_49, %c0_50] : memref<4x32x8xbf16, #tpu.memory_space<vmem>>, vector<1x32x8xbf16>
    %79 = vector.shape_cast %78 : vector<1x32x8xbf16> to vector<32x8xbf16>
    %cst_51 = arith.constant dense<0.000000e+00> : vector<16x8xf32>
    %80 = tpu.matmul %2, %79, %cst_51 {dimension_numbers = #tpu.dot_dimension_numbers<[1], [0], [0], [1], [0, 0, 1, 1], [], []>} : vector<16x32xbf16>, vector<32x8xbf16>, vector<16x8xf32> -> vector<16x8xf32>
    %81 = vector.shape_cast %74 : vector<16x8xf32> to vector<2x8x8xf32>
    %82 = arith.truncf %81 : vector<2x8x8xf32> to vector<2x8x8xbf16>
    %83 = vector.shape_cast %77 : vector<16x8xf32> to vector<2x8x8xf32>
    %84 = arith.truncf %83 : vector<2x8x8xf32> to vector<2x8x8xbf16>
    %85 = vector.shape_cast %80 : vector<16x8xf32> to vector<2x8x8xf32>
    %86 = arith.truncf %85 : vector<2x8x8xf32> to vector<2x8x8xbf16>
    "tpu.trace_start"() <{level = 10 : i32, message = "bid,bjd->bij"}> : () -> ()
    %cst_52 = arith.constant dense<0.000000e+00> : vector<2x8x8xf32>
    %87 = tpu.matmul %82, %84, %cst_52 {dimension_numbers = #tpu.dot_dimension_numbers<[2], [2], [1], [1], [0, 0, 0, 1, 1, 1], [0], [0]>} : vector<2x8x8xbf16>, vector<2x8x8xbf16>, vector<2x8x8xf32> -> vector<2x8x8xf32>
    "tpu.trace_stop"() : () -> ()
    %cst_53 = arith.constant dense<0xFF800000> : vector<2x8xf32>
    %88 = vector.multi_reduction <maximumf>, %87, %cst_53 [2] : vector<2x8x8xf32> to vector<2x8xf32>
    %89 = vector.shape_cast %88 : vector<2x8xf32> to vector<2x8x1xf32>
    %90 = vector.broadcast %89 : vector<2x8x1xf32> to vector<2x8x8xf32>
    %91 = arith.subf %87, %90 : vector<2x8x8xf32>
    %92 = math.exp %91 : vector<2x8x8xf32>
    %cst_54 = arith.constant dense<0.000000e+00> : vector<2x8xf32>
    %93 = vector.multi_reduction <add>, %92, %cst_54 [2] : vector<2x8x8xf32> to vector<2x8xf32>
    %94 = vector.shape_cast %93 : vector<2x8xf32> to vector<2x8x1xf32>
    %95 = tpu.reciprocal %94 {approx = true} : vector<2x8x1xf32> -> vector<2x8x1xf32>
    %96 = vector.broadcast %95 : vector<2x8x1xf32> to vector<2x8x8xf32>
    %97 = arith.mulf %92, %96 : vector<2x8x8xf32>
    %98 = arith.truncf %97 : vector<2x8x8xf32> to vector<2x8x8xbf16>
    "tpu.trace_start"() <{level = 10 : i32, message = "bij,bjd->bid"}> : () -> ()
    %cst_55 = arith.constant dense<0.000000e+00> : vector<2x8x8xf32>
    %99 = tpu.matmul %98, %86, %cst_55 {dimension_numbers = #tpu.dot_dimension_numbers<[2], [1], [1], [2], [0, 0, 0, 1, 1, 2], [0], [0]>} : vector<2x8x8xbf16>, vector<2x8x8xbf16>, vector<2x8x8xf32> -> vector<2x8x8xf32>
    "tpu.trace_stop"() : () -> ()
    %100 = vector.shape_cast %99 : vector<2x8x8xf32> to vector<16x8xf32>
    %101 = arith.truncf %100 : vector<16x8xf32> to vector<16x8xbf16>
    %c2_56 = arith.constant 2 : index
    %c0_57 = arith.constant 0 : index
    %c0_58 = arith.constant 0 : index
    %102 = vector.load %arg5[%c2_56, %c0_57, %c0_58] : memref<4x8x32xbf16, #tpu.memory_space<vmem>>, vector<1x8x32xbf16>
    %103 = vector.shape_cast %102 : vector<1x8x32xbf16> to vector<8x32xbf16>
    %cst_59 = arith.constant dense<0.000000e+00> : vector<16x32xf32>
    %104 = tpu.matmul %101, %103, %cst_59 {dimension_numbers = #tpu.dot_dimension_numbers<[1], [0], [0], [1], [0, 0, 1, 1], [], []>} : vector<16x8xbf16>, vector<8x32xbf16>, vector<16x32xf32> -> vector<16x32xf32>
    %105 = arith.addf %71, %104 : vector<16x32xf32>
    %c3 = arith.constant 3 : index
    %c0_60 = arith.constant 0 : index
    %c0_61 = arith.constant 0 : index
    %106 = vector.load %arg2[%c3, %c0_60, %c0_61] : memref<4x32x8xbf16, #tpu.memory_space<vmem>>, vector<1x32x8xbf16>
    %107 = vector.shape_cast %106 : vector<1x32x8xbf16> to vector<32x8xbf16>
    %cst_62 = arith.constant dense<0.000000e+00> : vector<16x8xf32>
    %108 = tpu.matmul %2, %107, %cst_62 {dimension_numbers = #tpu.dot_dimension_numbers<[1], [0], [0], [1], [0, 0, 1, 1], [], []>} : vector<16x32xbf16>, vector<32x8xbf16>, vector<16x8xf32> -> vector<16x8xf32>
    %c3_63 = arith.constant 3 : index
    %c0_64 = arith.constant 0 : index
    %c0_65 = arith.constant 0 : index
    %109 = vector.load %arg3[%c3_63, %c0_64, %c0_65] : memref<4x32x8xbf16, #tpu.memory_space<vmem>>, vector<1x32x8xbf16>
    %110 = vector.shape_cast %109 : vector<1x32x8xbf16> to vector<32x8xbf16>
    %cst_66 = arith.constant dense<0.000000e+00> : vector<16x8xf32>
    %111 = tpu.matmul %2, %110, %cst_66 {dimension_numbers = #tpu.dot_dimension_numbers<[1], [0], [0], [1], [0, 0, 1, 1], [], []>} : vector<16x32xbf16>, vector<32x8xbf16>, vector<16x8xf32> -> vector<16x8xf32>
    %c3_67 = arith.constant 3 : index
    %c0_68 = arith.constant 0 : index
    %c0_69 = arith.constant 0 : index
    %112 = vector.load %arg4[%c3_67, %c0_68, %c0_69] : memref<4x32x8xbf16, #tpu.memory_space<vmem>>, vector<1x32x8xbf16>
    %113 = vector.shape_cast %112 : vector<1x32x8xbf16> to vector<32x8xbf16>
    %cst_70 = arith.constant dense<0.000000e+00> : vector<16x8xf32>
    %114 = tpu.matmul %2, %113, %cst_70 {dimension_numbers = #tpu.dot_dimension_numbers<[1], [0], [0], [1], [0, 0, 1, 1], [], []>} : vector<16x32xbf16>, vector<32x8xbf16>, vector<16x8xf32> -> vector<16x8xf32>
    %115 = vector.shape_cast %108 : vector<16x8xf32> to vector<2x8x8xf32>
    %116 = arith.truncf %115 : vector<2x8x8xf32> to vector<2x8x8xbf16>
    %117 = vector.shape_cast %111 : vector<16x8xf32> to vector<2x8x8xf32>
    %118 = arith.truncf %117 : vector<2x8x8xf32> to vector<2x8x8xbf16>
    %119 = vector.shape_cast %114 : vector<16x8xf32> to vector<2x8x8xf32>
    %120 = arith.truncf %119 : vector<2x8x8xf32> to vector<2x8x8xbf16>
    "tpu.trace_start"() <{level = 10 : i32, message = "bid,bjd->bij"}> : () -> ()
    %cst_71 = arith.constant dense<0.000000e+00> : vector<2x8x8xf32>
    %121 = tpu.matmul %116, %118, %cst_71 {dimension_numbers = #tpu.dot_dimension_numbers<[2], [2], [1], [1], [0, 0, 0, 1, 1, 1], [0], [0]>} : vector<2x8x8xbf16>, vector<2x8x8xbf16>, vector<2x8x8xf32> -> vector<2x8x8xf32>
    "tpu.trace_stop"() : () -> ()
    %cst_72 = arith.constant dense<0xFF800000> : vector<2x8xf32>
    %122 = vector.multi_reduction <maximumf>, %121, %cst_72 [2] : vector<2x8x8xf32> to vector<2x8xf32>
    %123 = vector.shape_cast %122 : vector<2x8xf32> to vector<2x8x1xf32>
    %124 = vector.broadcast %123 : vector<2x8x1xf32> to vector<2x8x8xf32>
    %125 = arith.subf %121, %124 : vector<2x8x8xf32>
    %126 = math.exp %125 : vector<2x8x8xf32>
    %cst_73 = arith.constant dense<0.000000e+00> : vector<2x8xf32>
    %127 = vector.multi_reduction <add>, %126, %cst_73 [2] : vector<2x8x8xf32> to vector<2x8xf32>
    %128 = vector.shape_cast %127 : vector<2x8xf32> to vector<2x8x1xf32>
    %129 = tpu.reciprocal %128 {approx = true} : vector<2x8x1xf32> -> vector<2x8x1xf32>
    %130 = vector.broadcast %129 : vector<2x8x1xf32> to vector<2x8x8xf32>
    %131 = arith.mulf %126, %130 : vector<2x8x8xf32>
    %132 = arith.truncf %131 : vector<2x8x8xf32> to vector<2x8x8xbf16>
    "tpu.trace_start"() <{level = 10 : i32, message = "bij,bjd->bid"}> : () -> ()
    %cst_74 = arith.constant dense<0.000000e+00> : vector<2x8x8xf32>
    %133 = tpu.matmul %132, %120, %cst_74 {dimension_numbers = #tpu.dot_dimension_numbers<[2], [1], [1], [2], [0, 0, 0, 1, 1, 2], [0], [0]>} : vector<2x8x8xbf16>, vector<2x8x8xbf16>, vector<2x8x8xf32> -> vector<2x8x8xf32>
    "tpu.trace_stop"() : () -> ()
    %134 = vector.shape_cast %133 : vector<2x8x8xf32> to vector<16x8xf32>
    %135 = arith.truncf %134 : vector<16x8xf32> to vector<16x8xbf16>
    %c3_75 = arith.constant 3 : index
    %c0_76 = arith.constant 0 : index
    %c0_77 = arith.constant 0 : index
    %136 = vector.load %arg5[%c3_75, %c0_76, %c0_77] : memref<4x8x32xbf16, #tpu.memory_space<vmem>>, vector<1x8x32xbf16>
    %137 = vector.shape_cast %136 : vector<1x8x32xbf16> to vector<8x32xbf16>
    %cst_78 = arith.constant dense<0.000000e+00> : vector<16x32xf32>
    %138 = tpu.matmul %135, %137, %cst_78 {dimension_numbers = #tpu.dot_dimension_numbers<[1], [0], [0], [1], [0, 0, 1, 1], [], []>} : vector<16x8xbf16>, vector<8x32xbf16>, vector<16x32xf32> -> vector<16x32xf32>
    %139 = arith.addf %105, %138 : vector<16x32xf32>
    %c0_79 = arith.constant 0 : index
    %c0_80 = arith.constant 0 : index
    %140 = vector.load %arg6[%c0_79, %c0_80] : memref<1x32xf32, #tpu.memory_space<vmem>>, vector<1x32xf32>
    %141 = vector.broadcast %140 : vector<1x32xf32> to vector<16x32xf32>
    %142 = arith.addf %139, %141 : vector<16x32xf32>
    %143 = vector.shape_cast %142 : vector<16x32xf32> to vector<2x8x32xf32>
    %c0_81 = arith.constant 0 : index
    %c0_82 = arith.constant 0 : index
    %c0_83 = arith.constant 0 : index
    %144 = vector.load %arg7[%c0_81, %c0_82, %c0_83] : memref<2x8x32xf32, #tpu.memory_space<vmem>>, vector<2x8x32xf32>
    tpu.vector_store %arg7[%c0_81, %c0_82, %c0_83], %143 {strides = array<i32>} : memref<2x8x32xf32, #tpu.memory_space<vmem>>, vector<2x8x32xf32>,
    return
  }
  func.func @transform_0(%arg0: i32) -> (i32, i32, i32) {
    %c0_i32 = arith.constant 0 : i32
    %c0_i32_0 = arith.constant 0 : i32
    %c0_i32_1 = arith.constant 0 : i32
    return %arg0, %c0_i32, %c0_i32_0 : i32, i32, i32
  }
  func.func @transform_1(%arg0: i32) -> (i32, i32, i32) {
    %c0_i32 = arith.constant 0 : i32
    %c0_i32_0 = arith.constant 0 : i32
    %c0_i32_1 = arith.constant 0 : i32
    %c0_i32_2 = arith.constant 0 : i32
    return %c0_i32, %c0_i32_0, %c0_i32_1 : i32, i32, i32
  }
  func.func @transform_2(%arg0: i32) -> (i32, i32, i32) {
    %c0_i32 = arith.constant 0 : i32
    %c0_i32_0 = arith.constant 0 : i32
    %c0_i32_1 = arith.constant 0 : i32
    %c0_i32_2 = arith.constant 0 : i32
    return %c0_i32, %c0_i32_0, %c0_i32_1 : i32, i32, i32
  }
  func.func @transform_3(%arg0: i32) -> (i32, i32, i32) {
    %c0_i32 = arith.constant 0 : i32
    %c0_i32_0 = arith.constant 0 : i32
    %c0_i32_1 = arith.constant 0 : i32
    %c0_i32_2 = arith.constant 0 : i32
    return %c0_i32, %c0_i32_0, %c0_i32_1 : i32, i32, i32
  }
  func.func @transform_4(%arg0: i32) -> (i32, i32, i32) {
    %c0_i32 = arith.constant 0 : i32
    %c0_i32_0 = arith.constant 0 : i32
    %c0_i32_1 = arith.constant 0 : i32
    %c0_i32_2 = arith.constant 0 : i32
    return %c0_i32, %c0_i32_0, %c0_i32_1 : i32, i32, i32
  }
  func.func @transform_5(%arg0: i32) -> (i32, i32) {
    %c0_i32 = arith.constant 0 : i32
    %c0_i32_0 = arith.constant 0 : i32
    %c0_i32_1 = arith.constant 0 : i32
    return %c0_i32, %c0_i32_0 : i32, i32
  }
  func.func @transform_6(%arg0: i32) -> (i32, i32, i32) {
    %c0_i32 = arith.constant 0 : i32
    %c0_i32_0 = arith.constant 0 : i32
    %c0_i32_1 = arith.constant 0 : i32
    return %arg0, %c0_i32, %c0_i32_0 : i32, i32, i32
  }
}

</mosaic_0001>

<llo_original>
// kernel: tpu_custom_call.1
$region0: #{tpu_custom_call.1}
  #allocation0 [shape = 'u32[]', space=smem, size = 0x4, offset = 0x4, fixed_abs, tag = 'smem constant byte address 0x4 - core index']
  #allocation1 [shape = 'u32[144,128]{1,0:T(1,128)}', space=vmem, size = 0x12000, scoped, tag = 'internal scratch']
  %s0 = inlined_call_operand.vmem [shape: f32[2,8,32], index: 0, kind: input, shape index: {}]
  %s1 = inlined_call_operand.vmem [shape: bf16[4,32,8], index: 1, kind: input, shape index: {}]
  %s2 = inlined_call_operand.vmem [shape: bf16[4,32,8], index: 2, kind: input, shape index: {}]
  %s3 = inlined_call_operand.vmem [shape: bf16[4,32,8], index: 3, kind: input, shape index: {}]
  %s4 = inlined_call_operand.vmem [shape: bf16[4,8,32], index: 4, kind: input, shape index: {}]
  %s5 = inlined_call_operand.vmem [shape: f32[1,32], index: 5, kind: input, shape index: {}]
  %s6 = inlined_call_operand.hbm [shape: f32[2,8,32], index: 6, kind: output, shape index: {}]
  %s7 = sld [smem:[#allocation0]]
  $region34: #{tpu_custom_call.1} parent=0
    _
  %s9 = ssub.s32 1, %s7
  %s10 = scalar_select 0, %s9, %s7
  $region1: #{tpu_custom_call.1} parent=0
    #allocation2 [shape = 'u8[8192]{0}', space=vmem, size = 0x2000, scoped, tag = 'output window, operand 0, single buffered']
    #allocation3 [shape = 's32[1]{0}', space=sflag, size = 0x4, scoped, tag = 'scoped memory for tpu_custom_call.1']
    %11 = vsyncpa [#allocation3], 0
    // Predicated region
    $region2: #{tpu_custom_call.1} parent=1 // pred_check
      _
    $region3: #{tpu_custom_call.1} parent=1 // pred_check_branch
      %13 = sbr.rel (0) target = $region5
    $region4: #{tpu_custom_call.1} parent=1 // pred_region
      _
    $region5: #{tpu_custom_call.1} parent=1 // pred_fallthru
      _
    // Predicated region
    $region6: #{tpu_custom_call.1} parent=1 // pred_check
      _
    $region7: #{tpu_custom_call.1} parent=1 // pred_check_branch
      %15 = sbr.rel (0) target = $region9
    $region8: #{tpu_custom_call.1} parent=1 // pred_region
      _
    $region9: #{tpu_custom_call.1} parent=1 // pred_fallthru
      _
    // Predicated region
    $region10: #{tpu_custom_call.1} parent=1 // pred_check
      _
    $region11: #{tpu_custom_call.1} parent=1 // pred_check_branch
      %17 = sbr.rel (0) target = $region13
    $region12: #{tpu_custom_call.1} parent=1 // pred_region
      _
    $region13: #{tpu_custom_call.1} parent=1 // pred_fallthru
      _
    // Predicated region
    $region14: #{tpu_custom_call.1} parent=1 // pred_check
      _
    $region15: #{tpu_custom_call.1} parent=1 // pred_check_branch
      %19 = sbr.rel (0) target = $region17
    $region16: #{tpu_custom_call.1} parent=1 // pred_region
      _
    $region17: #{tpu_custom_call.1} parent=1 // pred_fallthru
      _
    // Predicated region
    $region18: #{tpu_custom_call.1} parent=1 // pred_check
      _
    $region19: #{tpu_custom_call.1} parent=1 // pred_check_branch
      %21 = sbr.rel (0) target = $region21
    $region20: #{tpu_custom_call.1} parent=1 // pred_region
      _
    $region21: #{tpu_custom_call.1} parent=1 // pred_fallthru
      _
    // Predicated region
    $region22: #{tpu_custom_call.1} parent=1 // pred_check
      _
    $region23: #{tpu_custom_call.1} parent=1 // pred_check_branch
      %23 = sbr.rel (0) target = $region25
    $region24: #{tpu_custom_call.1} parent=1 // pred_region
      _
    $region25: #{tpu_custom_call.1} parent=1 // pred_fallthru
      _
    %v25 = vld [vmem:[%s0] sm:$0xff]
    %v26 = vld [vmem:[%s0 + $0x8] sm:$0xff]
    %v27 = vpack.c.bf16 %v26, %v25
    %v28 = vld [vmem:[%s1] sm:$0xf]
    %v29 = vld [vmem:[%s1 + $0x4] sm:$0xf]
    %v30 = vld [vmem:[%s1 + $0x8] sm:$0xf]
    %v31 = vld [vmem:[%s1 + $0xc] sm:$0xf]
    %v36 = vunpack.c.l.b16 %v28
    %v37 = vunpack.c.l.b16 %v29
    %v38 = vunpack.c.l.b16 %v30
    %v39 = vunpack.c.l.b16 %v31
    %v40 = vpack.c.b16 %v37, %v36
    %v41 = vpack.c.b16 %v39, %v38
    %vm44 = vcmask 261120
    %v46 = vsel %vm44, %v27, 0
    %48 = vmatprep.subr.bf16.mxu0 0
    %49 = vmatpush1.bf16.msra.mxu0 %v40
    %50 = vmatprep.subr.bf16.mxu0 0
    %51 = vmatpush1.bf16.msra.mxu0 %v41
    %52 = vmatprep.subr.bf16.mxu0 0
    %53 = vmatpush1.bf16.msra.mxu0 0
    %54 = vmatprep.subr.bf16.mxu0 0
    %55 = vmatpush1.bf16.msra.mxu0 0
    %56 = vmatprep.subr.bf16.mxu0 0
    %57 = vmatpush1.bf16.msra.mxu0 0
    %58 = vmatprep.subr.bf16.mxu0 0
    %59 = vmatpush1.bf16.msra.mxu0 0
    %60 = vmatprep.subr.bf16.mxu0 0
    %61 = vmatpush1.bf16.msra.mxu0 0
    %62 = vmatprep.subr.bf16.mxu0 0
    %63 = vmatpush1.bf16.msra.mxu0 0
    %64 = vmatprep.subr.bf16.mxu0 0
    %65 = vmatpush1.bf16.msra.mxu0 0
    %66 = vmatprep.subr.bf16.mxu0 0
    %67 = vmatpush1.bf16.msra.mxu0 0
    %68 = vmatprep.subr.bf16.mxu0 0
    %69 = vmatpush1.bf16.msra.mxu0 0
    %70 = vmatprep.subr.bf16.mxu0 0
    %71 = vmatpush1.bf16.msra.mxu0 0
    %72 = vmatprep.subr.bf16.mxu0 0
    %73 = vmatpush1.bf16.msra.mxu0 0
    %74 = vmatprep.subr.bf16.mxu0 0
    %75 = vmatpush1.bf16.msra.mxu0 0
    %76 = vmatprep.subr.bf16.mxu0 0
    %77 = vmatpush1.bf16.msra.mxu0 0
    %78 = vmatprep.subr.bf16.mxu0 0
    %79 = vmatpush1.bf16.msra.mxu0 0
    %80 = vmatprep.mubr.bf16.mxu0 0
    %81 = vmatmul.mubr.bf16.gmra.mrb[0].mxu0 %v46
    %v82 = vpop.f32.mrb[0].mxu0
    %v83 = vadd.f32 0.0, %v82
    %v84 = vpop.f32.mrb[0].mxu0
    %v85 = vpop.f32.mrb[0].mxu0
    %v86 = vadd.f32 0.0, %v85
    %v87 = vpop.f32.mrb[0].mxu0
    %88 = vdwg.mxu0
    %v89 = vld [vmem:[%s2] sm:$0xf]
    %v90 = vld [vmem:[%s2 + $0x4] sm:$0xf]
    %v91 = vld [vmem:[%s2 + $0x8] sm:$0xf]
    %v92 = vld [vmem:[%s2 + $0xc] sm:$0xf]
    %v97 = vunpack.c.l.b16 %v89
    %v98 = vunpack.c.l.b16 %v90
    %v99 = vunpack.c.l.b16 %v91
    %v100 = vunpack.c.l.b16 %v92
    %v101 = vpack.c.b16 %v98, %v97
    %v102 = vpack.c.b16 %v100, %v99
    %105 = vmatprep.subr.bf16.mxu0 0
    %106 = vmatpush1.bf16.msra.mxu0 %v101
    %107 = vmatprep.subr.bf16.mxu0 0
    %108 = vmatpush1.bf16.msra.mxu0 %v102
    %109 = vmatprep.subr.bf16.mxu0 0
    %110 = vmatpush1.bf16.msra.mxu0 0
    %111 = vmatprep.subr.bf16.mxu0 0
    %112 = vmatpush1.bf16.msra.mxu0 0
    %113 = vmatprep.subr.bf16.mxu0 0
    %114 = vmatpush1.bf16.msra.mxu0 0
    %115 = vmatprep.subr.bf16.mxu0 0
    %116 = vmatpush1.bf16.msra.mxu0 0
    %117 = vmatprep.subr.bf16.mxu0 0
    %118 = vmatpush1.bf16.msra.mxu0 0
    %119 = vmatprep.subr.bf16.mxu0 0
    %120 = vmatpush1.bf16.msra.mxu0 0
    %121 = vmatprep.subr.bf16.mxu0 0
    %122 = vmatpush1.bf16.msra.mxu0 0
    %123 = vmatprep.subr.bf16.mxu0 0
    %124 = vmatpush1.bf16.msra.mxu0 0
    %125 = vmatprep.subr.bf16.mxu0 0
    %126 = vmatpush1.bf16.msra.mxu0 0
    %127 = vmatprep.subr.bf16.mxu0 0
    %128 = vmatpush1.bf16.msra.mxu0 0
    %129 = vmatprep.subr.bf16.mxu0 0
    %130 = vmatpush1.bf16.msra.mxu0 0
    %131 = vmatprep.subr.bf16.mxu0 0
    %132 = vmatpush1.bf16.msra.mxu0 0
    %133 = vmatprep.subr.bf16.mxu0 0
    %134 = vmatpush1.bf16.msra.mxu0 0
    %135 = vmatprep.subr.bf16.mxu0 0
    %136 = vmatpush1.bf16.msra.mxu0 0
    %137 = vmatprep.mubr.bf16.mxu0 0
    %138 = vmatmul.mubr.bf16.gmra.mrb[0].mxu0 %v46
    %v139 = vpop.f32.mrb[0].mxu0
    %v140 = vadd.f32 0.0, %v139
    %v141 = vpop.f32.mrb[0].mxu0
    %v142 = vpop.f32.mrb[0].mxu0
    %v143 = vadd.f32 0.0, %v142
    %v144 = vpop.f32.mrb[0].mxu0
    %145 = vdwg.mxu0
    %v146 = vld [vmem:[%s3] sm:$0xf]
    %v147 = vld [vmem:[%s3 + $0x4] sm:$0xf]
    %v148 = vld [vmem:[%s3 + $0x8] sm:$0xf]
    %v149 = vld [vmem:[%s3 + $0xc] sm:$0xf]
    %v154 = vunpack.c.l.b16 %v146
    %v155 = vunpack.c.l.b16 %v147
    %v156 = vunpack.c.l.b16 %v148
    %v157 = vunpack.c.l.b16 %v149
    %v158 = vpack.c.b16 %v155, %v154
    %v159 = vpack.c.b16 %v157, %v156
    %162 = vmatprep.subr.bf16.mxu0 0
    %163 = vmatpush1.bf16.msra.mxu0 %v158
    %164 = vmatprep.subr.bf16.mxu0 0
    %165 = vmatpush1.bf16.msra.mxu0 %v159
    %166 = vmatprep.subr.bf16.mxu0 0
    %167 = vmatpush1.bf16.msra.mxu0 0
    %168 = vmatprep.subr.bf16.mxu0 0
    %169 = vmatpush1.bf16.msra.mxu0 0
    %170 = vmatprep.subr.bf16.mxu0 0
    %171 = vmatpush1.bf16.msra.mxu0 0
    %172 = vmatprep.subr.bf16.mxu0 0
    %173 = vmatpush1.bf16.msra.mxu0 0
    %174 = vmatprep.subr.bf16.mxu0 0
    %175 = vmatpush1.bf16.msra.mxu0 0
    %176 = vmatprep.subr.bf16.mxu0 0
    %177 = vmatpush1.bf16.msra.mxu0 0
    %178 = vmatprep.subr.bf16.mxu0 0
    %179 = vmatpush1.bf16.msra.mxu0 0
    %180 = vmatprep.subr.bf16.mxu0 0
    %181 = vmatpush1.bf16.msra.mxu0 0
    %182 = vmatprep.subr.bf16.mxu0 0
    %183 = vmatpush1.bf16.msra.mxu0 0
    %184 = vmatprep.subr.bf16.mxu0 0
    %185 = vmatpush1.bf16.msra.mxu0 0
    %186 = vmatprep.subr.bf16.mxu0 0
    %187 = vmatpush1.bf16.msra.mxu0 0
    %188 = vmatprep.subr.bf16.mxu0 0
    %189 = vmatpush1.bf16.msra.mxu0 0
    %190 = vmatprep.subr.bf16.mxu0 0
    %191 = vmatpush1.bf16.msra.mxu0 0
    %192 = vmatprep.subr.bf16.mxu0 0
    %193 = vmatpush1.bf16.msra.mxu0 0
    %194 = vmatprep.mubr.bf16.mxu0 0
    %195 = vmatmul.mubr.bf16.gmra.mrb[0].mxu0 %v46
    %v196 = vpop.f32.mrb[0].mxu0
    %v197 = vadd.f32 0.0, %v196
    %v198 = vpop.f32.mrb[0].mxu0
    %v199 = vpop.f32.mrb[0].mxu0
    %v200 = vadd.f32 0.0, %v199
    %v201 = vpop.f32.mrb[0].mxu0
    %202 = vdwg.mxu0
    %v203 = vpack.c.bf16 %v83, %v83
    %v204 = vpack.c.bf16 %v86, %v86
    %v205 = vpack.c.bf16 %v140, %v140
    %v206 = vpack.c.bf16 %v143, %v143
    %v207 = vpack.c.bf16 %v197, %v197
    %v208 = vpack.c.bf16 %v200, %v200
    %vm209 = vcmask 64512
    %v211 = vsel %vm209, %v203, 0
    %v214 = vsel %vm209, %v205, 0
    %216 = vmatprep.subr.bf16.mxu0 0
    %217 = vmatpush1.bf16.xpose.msra.mxu0 %v214
    %218 = vmatprep.subr.bf16.mxu0 0
    %219 = vmatpush1.bf16.xpose.msra.mxu0 0
    %220 = vmatprep.subr.bf16.mxu0 0
    %221 = vmatpush1.bf16.xpose.msra.mxu0 0
    %222 = vmatprep.subr.bf16.mxu0 0
    %223 = vmatpush1.bf16.xpose.msra.mxu0 0
    %224 = vmatprep.subr.bf16.mxu0 0
    %225 = vmatpush1.bf16.xpose.msra.mxu0 0
    %226 = vmatprep.subr.bf16.mxu0 0
    %227 = vmatpush1.bf16.xpose.msra.mxu0 0
    %228 = vmatprep.subr.bf16.mxu0 0
    %229 = vmatpush1.bf16.xpose.msra.mxu0 0
    %230 = vmatprep.subr.bf16.mxu0 0
    %231 = vmatpush1.bf16.xpose.msra.mxu0 0
    %232 = vmatprep.subr.bf16.mxu0 0
    %233 = vmatpush1.bf16.xpose.msra.mxu0 0
    %234 = vmatprep.subr.bf16.mxu0 0
    %235 = vmatpush1.bf16.xpose.msra.mxu0 0
    %236 = vmatprep.subr.bf16.mxu0 0
    %237 = vmatpush1.bf16.xpose.msra.mxu0 0
    %238 = vmatprep.subr.bf16.mxu0 0
    %239 = vmatpush1.bf16.xpose.msra.mxu0 0
    %240 = vmatprep.subr.bf16.mxu0 0
    %241 = vmatpush1.bf16.xpose.msra.mxu0 0
    %242 = vmatprep.subr.bf16.mxu0 0
    %243 = vmatpush1.bf16.xpose.msra.mxu0 0
    %244 = vmatprep.subr.bf16.mxu0 0
    %245 = vmatpush1.bf16.xpose.msra.mxu0 0
    %246 = vmatprep.subr.bf16.mxu0 0
    %247 = vmatpush1.bf16.xpose.msra.mxu0 0
    %248 = vmatprep.mubr.bf16.mxu0 0
    %249 = vmatmul.mubr.bf16.gmra.mrb[0].mxu0 %v211
    %v250 = vpop.f32.mrb[0].mxu0
    %v251 = vadd.f32 0.0, %v250
    %v252 = vpop.f32.mrb[0].mxu0
    %v253 = vpop.f32.mrb[0].mxu0
    %v254 = vpop.f32.mrb[0].mxu0
    %255 = vdwg.mxu0
    %v257 = vsel %vm209, %v204, 0
    %v260 = vsel %vm209, %v206, 0
    %262 = vmatprep.subr.bf16.mxu0 0
    %263 = vmatpush1.bf16.xpose.msra.mxu0 %v260
    %264 = vmatprep.subr.bf16.mxu0 0
    %265 = vmatpush1.bf16.xpose.msra.mxu0 0
    %266 = vmatprep.subr.bf16.mxu0 0
    %267 = vmatpush1.bf16.xpose.msra.mxu0 0
    %268 = vmatprep.subr.bf16.mxu0 0
    %269 = vmatpush1.bf16.xpose.msra.mxu0 0
    %270 = vmatprep.subr.bf16.mxu0 0
    %271 = vmatpush1.bf16.xpose.msra.mxu0 0
    %272 = vmatprep.subr.bf16.mxu0 0
    %273 = vmatpush1.bf16.xpose.msra.mxu0 0
    %274 = vmatprep.subr.bf16.mxu0 0
    %275 = vmatpush1.bf16.xpose.msra.mxu0 0
    %276 = vmatprep.subr.bf16.mxu0 0
    %277 = vmatpush1.bf16.xpose.msra.mxu0 0
    %278 = vmatprep.subr.bf16.mxu0 0
    %279 = vmatpush1.bf16.xpose.msra.mxu0 0
    %280 = vmatprep.subr.bf16.mxu0 0
    %281 = vmatpush1.bf16.xpose.msra.mxu0 0
    %282 = vmatprep.subr.bf16.mxu0 0
    %283 = vmatpush1.bf16.xpose.msra.mxu0 0
    %284 = vmatprep.subr.bf16.mxu0 0
    %285 = vmatpush1.bf16.xpose.msra.mxu0 0
    %286 = vmatprep.subr.bf16.mxu0 0
    %287 = vmatpush1.bf16.xpose.msra.mxu0 0
    %288 = vmatprep.subr.bf16.mxu0 0
    %289 = vmatpush1.bf16.xpose.msra.mxu0 0
    %290 = vmatprep.subr.bf16.mxu0 0
    %291 = vmatpush1.bf16.xpose.msra.mxu0 0
    %292 = vmatprep.subr.bf16.mxu0 0
    %293 = vmatpush1.bf16.xpose.msra.mxu0 0
    %294 = vmatprep.mubr.bf16.mxu0 0
    %295 = vmatmul.mubr.bf16.gmra.mrb[0].mxu0 %v257
    %v296 = vpop.f32.mrb[0].mxu0
    %v297 = vadd.f32 0.0, %v296
    %v298 = vpop.f32.mrb[0].mxu0
    %v299 = vpop.f32.mrb[0].mxu0
    %v300 = vpop.f32.mrb[0].mxu0
    %301 = vdwg.mxu0
    %v302 = vsel %vm209, %v251, -inf
    %303 = vmax.xlane.f32.xlu0 %v302
    %v304 = vpop.xlane.xlu0 %303
    %v305 = vsel %vm209, %v297, -inf
    %306 = vmax.xlane.f32.xlu0 %v305
    %v307 = vpop.xlane.xlu0 %306
    %v308 = vsub.f32 %v251, %v304
    %v309 = vsub.f32 %v297, %v307
    %v310 = vmul.f32 %v308, 1.442695
    %v311 = vpow.pop %v310
    %v312 = vmul.f32 %v309, 1.442695
    %v313 = vpow.pop %v312
    %v314 = vsel %vm209, %v311, 0.0
    %315 = vadd.xlane.f32.xlu0 %v314
    %v316 = vpop.xlane.xlu0 %315
    %v317 = vsel %vm209, %v313, 0.0
    %318 = vadd.xlane.f32.xlu0 %v317
    %v319 = vpop.xlane.xlu0 %318
    %v320 = vrcp.pop %v316
    %v321 = vrcp.pop %v319
    %v322 = vmul.f32 %v311, %v320
    %v323 = vmul.f32 %v313, %v321
    %v324 = vpack.c.bf16 %v322, %v322
    %v325 = vpack.c.bf16 %v323, %v323
    %v327 = vsel %vm209, %v324, 0
    %vm329 = vcmask 1043456
    %v331 = vsel %vm329, %v207, 0
    %333 = vmatprep.subr.bf16.mxu0 0
    %334 = vmatpush1.bf16.msra.mxu0 %v331
    %335 = vmatprep.subr.bf16.mxu0 0
    %336 = vmatpush1.bf16.msra.mxu0 0
    %337 = vmatprep.subr.bf16.mxu0 0
    %338 = vmatpush1.bf16.msra.mxu0 0
    %339 = vmatprep.subr.bf16.mxu0 0
    %340 = vmatpush1.bf16.msra.mxu0 0
    %341 = vmatprep.subr.bf16.mxu0 0
    %342 = vmatpush1.bf16.msra.mxu0 0
    %343 = vmatprep.subr.bf16.mxu0 0
    %344 = vmatpush1.bf16.msra.mxu0 0
    %345 = vmatprep.subr.bf16.mxu0 0
    %346 = vmatpush1.bf16.msra.mxu0 0
    %347 = vmatprep.subr.bf16.mxu0 0
    %348 = vmatpush1.bf16.msra.mxu0 0
    %349 = vmatprep.subr.bf16.mxu0 0
    %350 = vmatpush1.bf16.msra.mxu0 0
    %351 = vmatprep.subr.bf16.mxu0 0
    %352 = vmatpush1.bf16.msra.mxu0 0
    %353 = vmatprep.subr.bf16.mxu0 0
    %354 = vmatpush1.bf16.msra.mxu0 0
    %355 = vmatprep.subr.bf16.mxu0 0
    %356 = vmatpush1.bf16.msra.mxu0 0
    %357 = vmatprep.subr.bf16.mxu0 0
    %358 = vmatpush1.bf16.msra.mxu0 0
    %359 = vmatprep.subr.bf16.mxu0 0
    %360 = vmatpush1.bf16.msra.mxu0 0
    %361 = vmatprep.subr.bf16.mxu0 0
    %362 = vmatpush1.bf16.msra.mxu0 0
    %363 = vmatprep.subr.bf16.mxu0 0
    %364 = vmatpush1.bf16.msra.mxu0 0
    %365 = vmatprep.mubr.bf16.mxu0 0
    %366 = vmatmul.mubr.bf16.gmra.mrb[0].mxu0 %v327
    %v367 = vpop.f32.mrb[0].mxu0
    %v368 = vadd.f32 0.0, %v367
    %v369 = vpop.f32.mrb[0].mxu0
    %v370 = vpop.f32.mrb[0].mxu0
    %v371 = vpop.f32.mrb[0].mxu0
    %372 = vdwg.mxu0
    %v374 = vsel %vm209, %v325, 0
    %v377 = vsel %vm329, %v208, 0
    %379 = vmatprep.subr.bf16.mxu0 0
    %380 = vmatpush1.bf16.msra.mxu0 %v377
    %381 = vmatprep.subr.bf16.mxu0 0
    %382 = vmatpush1.bf16.msra.mxu0 0
    %383 = vmatprep.subr.bf16.mxu0 0
    %384 = vmatpush1.bf16.msra.mxu0 0
    %385 = vmatprep.subr.bf16.mxu0 0
    %386 = vmatpush1.bf16.msra.mxu0 0
    %387 = vmatprep.subr.bf16.mxu0 0
    %388 = vmatpush1.bf16.msra.mxu0 0
    %389 = vmatprep.subr.bf16.mxu0 0
    %390 = vmatpush1.bf16.msra.mxu0 0
    %391 = vmatprep.subr.bf16.mxu0 0
    %392 = vmatpush1.bf16.msra.mxu0 0
    %393 = vmatprep.subr.bf16.mxu0 0
    %394 = vmatpush1.bf16.msra.mxu0 0
    %395 = vmatprep.subr.bf16.mxu0 0
    %396 = vmatpush1.bf16.msra.mxu0 0
    %397 = vmatprep.subr.bf16.mxu0 0
    %398 = vmatpush1.bf16.msra.mxu0 0
    %399 = vmatprep.subr.bf16.mxu0 0
    %400 = vmatpush1.bf16.msra.mxu0 0
    %401 = vmatprep.subr.bf16.mxu0 0
    %402 = vmatpush1.bf16.msra.mxu0 0
    %403 = vmatprep.subr.bf16.mxu0 0
    %404 = vmatpush1.bf16.msra.mxu0 0
    %405 = vmatprep.subr.bf16.mxu0 0
    %406 = vmatpush1.bf16.msra.mxu0 0
    %407 = vmatprep.subr.bf16.mxu0 0
    %408 = vmatpush1.bf16.msra.mxu0 0
    %409 = vmatprep.subr.bf16.mxu0 0
    %410 = vmatpush1.bf16.msra.mxu0 0
    %411 = vmatprep.mubr.bf16.mxu0 0
    %412 = vmatmul.mubr.bf16.gmra.mrb[0].mxu0 %v374
    %v413 = vpop.f32.mrb[0].mxu0
    %v414 = vadd.f32 0.0, %v413
    %v415 = vpop.f32.mrb[0].mxu0
    %v416 = vpop.f32.mrb[0].mxu0
    %v417 = vpop.f32.mrb[0].mxu0
    %418 = vdwg.mxu0
    %v419 = vpack.c.bf16 %v414, %v368
    %v420 = vld [vmem:[%s4] sm:$0xf]
    %s421 = scalar_lea.vmem %s1, 16
    %v422 = vld [vmem:[%s421] sm:$0xf]
    %v423 = vld [vmem:[%s421 + $0x4] sm:$0xf]
    %v424 = vld [vmem:[%s421 + $0x8] sm:$0xf]
    %v425 = vld [vmem:[%s421 + $0xc] sm:$0xf]
    %v430 = vunpack.c.l.b16 %v422
    %v431 = vunpack.c.l.b16 %v423
    %v432 = vunpack.c.l.b16 %v424
    %v433 = vunpack.c.l.b16 %v425
    %v434 = vpack.c.b16 %v431, %v430
    %v435 = vpack.c.b16 %v433, %v432
    %438 = vmatprep.subr.bf16.mxu0 0
    %439 = vmatpush1.bf16.msra.mxu0 %v434
    %440 = vmatprep.subr.bf16.mxu0 0
    %441 = vmatpush1.bf16.msra.mxu0 %v435
    %442 = vmatprep.subr.bf16.mxu0 0
    %443 = vmatpush1.bf16.msra.mxu0 0
    %444 = vmatprep.subr.bf16.mxu0 0
    %445 = vmatpush1.bf16.msra.mxu0 0
    %446 = vmatprep.subr.bf16.mxu0 0
    %447 = vmatpush1.bf16.msra.mxu0 0
    %448 = vmatprep.subr.bf16.mxu0 0
    %449 = vmatpush1.bf16.msra.mxu0 0
    %450 = vmatprep.subr.bf16.mxu0 0
    %451 = vmatpush1.bf16.msra.mxu0 0
    %452 = vmatprep.subr.bf16.mxu0 0
    %453 = vmatpush1.bf16.msra.mxu0 0
    %454 = vmatprep.subr.bf16.mxu0 0
    %455 = vmatpush1.bf16.msra.mxu0 0
    %456 = vmatprep.subr.bf16.mxu0 0
    %457 = vmatpush1.bf16.msra.mxu0 0
    %458 = vmatprep.subr.bf16.mxu0 0
    %459 = vmatpush1.bf16.msra.mxu0 0
    %460 = vmatprep.subr.bf16.mxu0 0
    %461 = vmatpush1.bf16.msra.mxu0 0
    %462 = vmatprep.subr.bf16.mxu0 0
    %463 = vmatpush1.bf16.msra.mxu0 0
    %464 = vmatprep.subr.bf16.mxu0 0
    %465 = vmatpush1.bf16.msra.mxu0 0
    %466 = vmatprep.subr.bf16.mxu0 0
    %467 = vmatpush1.bf16.msra.mxu0 0
    %468 = vmatprep.subr.bf16.mxu0 0
    %469 = vmatpush1.bf16.msra.mxu0 0
    %470 = vmatprep.mubr.bf16.mxu0 0
    %471 = vmatmul.mubr.bf16.gmra.mrb[0].mxu0 %v46
    %v472 = vpop.f32.mrb[0].mxu0
    %v473 = vadd.f32 0.0, %v472
    %v474 = vpop.f32.mrb[0].mxu0
    %v475 = vpop.f32.mrb[0].mxu0
    %v476 = vadd.f32 0.0, %v475
    %v477 = vpop.f32.mrb[0].mxu0
    %478 = vdwg.mxu0
    %s479 = scalar_lea.vmem %s2, 16
    %v480 = vld [vmem:[%s479] sm:$0xf]
    %v481 = vld [vmem:[%s479 + $0x4] sm:$0xf]
    %v482 = vld [vmem:[%s479 + $0x8] sm:$0xf]
    %v483 = vld [vmem:[%s479 + $0xc] sm:$0xf]
    %v488 = vunpack.c.l.b16 %v480
    %v489 = vunpack.c.l.b16 %v481
    %v490 = vunpack.c.l.b16 %v482
    %v491 = vunpack.c.l.b16 %v483
    %v492 = vpack.c.b16 %v489, %v488
    %v493 = vpack.c.b16 %v491, %v490
    %496 = vmatprep.subr.bf16.mxu0 0
    %497 = vmatpush1.bf16.msra.mxu0 %v492
    %498 = vmatprep.subr.bf16.mxu0 0
    %499 = vmatpush1.bf16.msra.mxu0 %v493
    %500 = vmatprep.subr.bf16.mxu0 0
    %501 = vmatpush1.bf16.msra.mxu0 0
    %502 = vmatprep.subr.bf16.mxu0 0
    %503 = vmatpush1.bf16.msra.mxu0 0
    %504 = vmatprep.subr.bf16.mxu0 0
    %505 = vmatpush1.bf16.msra.mxu0 0
    %506 = vmatprep.subr.bf16.mxu0 0
    %507 = vmatpush1.bf16.msra.mxu0 0
    %508 = vmatprep.subr.bf16.mxu0 0
    %509 = vmatpush1.bf16.msra.mxu0 0
    %510 = vmatprep.subr.bf16.mxu0 0
    %511 = vmatpush1.bf16.msra.mxu0 0
    %512 = vmatprep.subr.bf16.mxu0 0
    %513 = vmatpush1.bf16.msra.mxu0 0
    %514 = vmatprep.subr.bf16.mxu0 0
    %515 = vmatpush1.bf16.msra.mxu0 0
    %516 = vmatprep.subr.bf16.mxu0 0
    %517 = vmatpush1.bf16.msra.mxu0 0
    %518 = vmatprep.subr.bf16.mxu0 0
    %519 = vmatpush1.bf16.msra.mxu0 0
    %520 = vmatprep.subr.bf16.mxu0 0
    %521 = vmatpush1.bf16.msra.mxu0 0
    %522 = vmatprep.subr.bf16.mxu0 0
    %523 = vmatpush1.bf16.msra.mxu0 0
    %524 = vmatprep.subr.bf16.mxu0 0
    %525 = vmatpush1.bf16.msra.mxu0 0
    %526 = vmatprep.subr.bf16.mxu0 0
    %527 = vmatpush1.bf16.msra.mxu0 0
    %528 = vmatprep.mubr.bf16.mxu0 0
    %529 = vmatmul.mubr.bf16.gmra.mrb[0].mxu0 %v46
    %v530 = vpop.f32.mrb[0].mxu0
    %v531 = vadd.f32 0.0, %v530
    %v532 = vpop.f32.mrb[0].mxu0
    %v533 = vpop.f32.mrb[0].mxu0
    %v534 = vadd.f32 0.0, %v533
    %v535 = vpop.f32.mrb[0].mxu0
    %536 = vdwg.mxu0
    %s537 = scalar_lea.vmem %s3, 16
    %v538 = vld [vmem:[%s537] sm:$0xf]
    %v539 = vld [vmem:[%s537 + $0x4] sm:$0xf]
    %v540 = vld [vmem:[%s537 + $0x8] sm:$0xf]
    %v541 = vld [vmem:[%s537 + $0xc] sm:$0xf]
    %v546 = vunpack.c.l.b16 %v538
    %v547 = vunpack.c.l.b16 %v539
    %v548 = vunpack.c.l.b16 %v540
    %v549 = vunpack.c.l.b16 %v541
    %v550 = vpack.c.b16 %v547, %v546
    %v551 = vpack.c.b16 %v549, %v548
    %554 = vmatprep.subr.bf16.mxu0 0
    %555 = vmatpush1.bf16.msra.mxu0 %v550
    %556 = vmatprep.subr.bf16.mxu0 0
    %557 = vmatpush1.bf16.msra.mxu0 %v551
    %558 = vmatprep.subr.bf16.mxu0 0
    %559 = vmatpush1.bf16.msra.mxu0 0
    %560 = vmatprep.subr.bf16.mxu0 0
    %561 = vmatpush1.bf16.msra.mxu0 0
    %562 = vmatprep.subr.bf16.mxu0 0
    %563 = vmatpush1.bf16.msra.mxu0 0
    %564 = vmatprep.subr.bf16.mxu0 0
    %565 = vmatpush1.bf16.msra.mxu0 0
    %566 = vmatprep.subr.bf16.mxu0 0
    %567 = vmatpush1.bf16.msra.mxu0 0
    %568 = vmatprep.subr.bf16.mxu0 0
    %569 = vmatpush1.bf16.msra.mxu0 0
    %570 = vmatprep.subr.bf16.mxu0 0
    %571 = vmatpush1.bf16.msra.mxu0 0
    %572 = vmatprep.subr.bf16.mxu0 0
    %573 = vmatpush1.bf16.msra.mxu0 0
    %574 = vmatprep.subr.bf16.mxu0 0
    %575 = vmatpush1.bf16.msra.mxu0 0
    %576 = vmatprep.subr.bf16.mxu0 0
    %577 = vmatpush1.bf16.msra.mxu0 0
    %578 = vmatprep.subr.bf16.mxu0 0
    %579 = vmatpush1.bf16.msra.mxu0 0
    %580 = vmatprep.subr.bf16.mxu0 0
    %581 = vmatpush1.bf16.msra.mxu0 0
    %582 = vmatprep.subr.bf16.mxu0 0
    %583 = vmatpush1.bf16.msra.mxu0 0
    %584 = vmatprep.subr.bf16.mxu0 0
    %585 = vmatpush1.bf16.msra.mxu0 0
    %586 = vmatprep.mubr.bf16.mxu0 0
    %587 = vmatmul.mubr.bf16.gmra.mrb[0].mxu0 %v46
    %v588 = vpop.f32.mrb[0].mxu0
    %v589 = vadd.f32 0.0, %v588
    %v590 = vpop.f32.mrb[0].mxu0
    %v591 = vpop.f32.mrb[0].mxu0
    %v592 = vadd.f32 0.0, %v591
    %v593 = vpop.f32.mrb[0].mxu0
    %594 = vdwg.mxu0
    %v595 = vpack.c.bf16 %v473, %v473
    %v596 = vpack.c.bf16 %v476, %v476
    %v597 = vpack.c.bf16 %v531, %v531
    %v598 = vpack.c.bf16 %v534, %v534
    %v599 = vpack.c.bf16 %v589, %v589
    %v600 = vpack.c.bf16 %v592, %v592
    %v602 = vsel %vm209, %v595, 0
    %v605 = vsel %vm209, %v597, 0
    %607 = vmatprep.subr.bf16.mxu0 0
    %608 = vmatpush1.bf16.xpose.msra.mxu0 %v605
    %609 = vmatprep.subr.bf16.mxu0 0
    %610 = vmatpush1.bf16.xpose.msra.mxu0 0
    %611 = vmatprep.subr.bf16.mxu0 0
    %612 = vmatpush1.bf16.xpose.msra.mxu0 0
    %613 = vmatprep.subr.bf16.mxu0 0
    %614 = vmatpush1.bf16.xpose.msra.mxu0 0
    %615 = vmatprep.subr.bf16.mxu0 0
    %616 = vmatpush1.bf16.xpose.msra.mxu0 0
    %617 = vmatprep.subr.bf16.mxu0 0
    %618 = vmatpush1.bf16.xpose.msra.mxu0 0
    %619 = vmatprep.subr.bf16.mxu0 0
    %620 = vmatpush1.bf16.xpose.msra.mxu0 0
    %621 = vmatprep.subr.bf16.mxu0 0
    %622 = vmatpush1.bf16.xpose.msra.mxu0 0
    %623 = vmatprep.subr.bf16.mxu0 0
    %624 = vmatpush1.bf16.xpose.msra.mxu0 0
    %625 = vmatprep.subr.bf16.mxu0 0
    %626 = vmatpush1.bf16.xpose.msra.mxu0 0
    %627 = vmatprep.subr.bf16.mxu0 0
    %628 = vmatpush1.bf16.xpose.msra.mxu0 0
    %629 = vmatprep.subr.bf16.mxu0 0
    %630 = vmatpush1.bf16.xpose.msra.mxu0 0
    %631 = vmatprep.subr.bf16.mxu0 0
    %632 = vmatpush1.bf16.xpose.msra.mxu0 0
    %633 = vmatprep.subr.bf16.mxu0 0
    %634 = vmatpush1.bf16.xpose.msra.mxu0 0
    %635 = vmatprep.subr.bf16.mxu0 0
    %636 = vmatpush1.bf16.xpose.msra.mxu0 0
    %637 = vmatprep.subr.bf16.mxu0 0
    %638 = vmatpush1.bf16.xpose.msra.mxu0 0
    %639 = vmatprep.mubr.bf16.mxu0 0
    %640 = vmatmul.mubr.bf16.gmra.mrb[0].mxu0 %v602
    %v641 = vpop.f32.mrb[0].mxu0
    %v642 = vadd.f32 0.0, %v641
    %v643 = vpop.f32.mrb[0].mxu0
    %v644 = vpop.f32.mrb[0].mxu0
    %v645 = vpop.f32.mrb[0].mxu0
    %646 = vdwg.mxu0
    %v648 = vsel %vm209, %v596, 0
    %v651 = vsel %vm209, %v598, 0
    %653 = vmatprep.subr.bf16.mxu0 0
    %654 = vmatpush1.bf16.xpose.msra.mxu0 %v651
    %655 = vmatprep.subr.bf16.mxu0 0
    %656 = vmatpush1.bf16.xpose.msra.mxu0 0
    %657 = vmatprep.subr.bf16.mxu0 0
    %658 = vmatpush1.bf16.xpose.msra.mxu0 0
    %659 = vmatprep.subr.bf16.mxu0 0
    %660 = vmatpush1.bf16.xpose.msra.mxu0 0
    %661 = vmatprep.subr.bf16.mxu0 0
    %662 = vmatpush1.bf16.xpose.msra.mxu0 0
    %663 = vmatprep.subr.bf16.mxu0 0
    %664 = vmatpush1.bf16.xpose.msra.mxu0 0
    %665 = vmatprep.subr.bf16.mxu0 0
    %666 = vmatpush1.bf16.xpose.msra.mxu0 0
    %667 = vmatprep.subr.bf16.mxu0 0
    %668 = vmatpush1.bf16.xpose.msra.mxu0 0
    %669 = vmatprep.subr.bf16.mxu0 0
    %670 = vmatpush1.bf16.xpose.msra.mxu0 0
    %671 = vmatprep.subr.bf16.mxu0 0
    %672 = vmatpush1.bf16.xpose.msra.mxu0 0
    %673 = vmatprep.subr.bf16.mxu0 0
    %674 = vmatpush1.bf16.xpose.msra.mxu0 0
    %675 = vmatprep.subr.bf16.mxu0 0
    %676 = vmatpush1.bf16.xpose.msra.mxu0 0
    %677 = vmatprep.subr.bf16.mxu0 0
    %678 = vmatpush1.bf16.xpose.msra.mxu0 0
    %679 = vmatprep.subr.bf16.mxu0 0
    %680 = vmatpush1.bf16.xpose.msra.mxu0 0
    %681 = vmatprep.subr.bf16.mxu0 0
    %682 = vmatpush1.bf16.xpose.msra.mxu0 0
    %683 = vmatprep.subr.bf16.mxu0 0
    %684 = vmatpush1.bf16.xpose.msra.mxu0 0
    %685 = vmatprep.mubr.bf16.mxu0 0
    %686 = vmatmul.mubr.bf16.gmra.mrb[0].mxu0 %v648
    %v687 = vpop.f32.mrb[0].mxu0
    %v688 = vadd.f32 0.0, %v687
    %v689 = vpop.f32.mrb[0].mxu0
    %v690 = vpop.f32.mrb[0].mxu0
    %v691 = vpop.f32.mrb[0].mxu0
    %692 = vdwg.mxu0
    %v693 = vsel %vm209, %v642, -inf
    %694 = vmax.xlane.f32.xlu0 %v693
    %v695 = vpop.xlane.xlu0 %694
    %v696 = vsel %vm209, %v688, -inf
    %697 = vmax.xlane.f32.xlu0 %v696
    %v698 = vpop.xlane.xlu0 %697
    %v699 = vsub.f32 %v642, %v695
    %v700 = vsub.f32 %v688, %v698
    %v701 = vmul.f32 %v699, 1.442695
    %v702 = vpow.pop %v701
    %v703 = vmul.f32 %v700, 1.442695
    %v704 = vpow.pop %v703
    %v705 = vsel %vm209, %v702, 0.0
    %706 = vadd.xlane.f32.xlu0 %v705
    %v707 = vpop.xlane.xlu0 %706
    %v708 = vsel %vm209, %v704, 0.0
    %709 = vadd.xlane.f32.xlu0 %v708
    %v710 = vpop.xlane.xlu0 %709
    %v711 = vrcp.pop %v707
    %v712 = vrcp.pop %v710
    %v713 = vmul.f32 %v702, %v711
    %v714 = vmul.f32 %v704, %v712
    %v715 = vpack.c.bf16 %v713, %v713
    %v716 = vpack.c.bf16 %v714, %v714
    %v718 = vsel %vm209, %v715, 0
    %v721 = vsel %vm329, %v599, 0
    %723 = vmatprep.subr.bf16.mxu0 0
    %724 = vmatpush1.bf16.msra.mxu0 %v721
    %725 = vmatprep.subr.bf16.mxu0 0
    %726 = vmatpush1.bf16.msra.mxu0 0
    %727 = vmatprep.subr.bf16.mxu0 0
    %728 = vmatpush1.bf16.msra.mxu0 0
    %729 = vmatprep.subr.bf16.mxu0 0
    %730 = vmatpush1.bf16.msra.mxu0 0
    %731 = vmatprep.subr.bf16.mxu0 0
    %732 = vmatpush1.bf16.msra.mxu0 0
    %733 = vmatprep.subr.bf16.mxu0 0
    %734 = vmatpush1.bf16.msra.mxu0 0
    %735 = vmatprep.subr.bf16.mxu0 0
    %736 = vmatpush1.bf16.msra.mxu0 0
    %737 = vmatprep.subr.bf16.mxu0 0
    %738 = vmatpush1.bf16.msra.mxu0 0
    %739 = vmatprep.subr.bf16.mxu0 0
    %740 = vmatpush1.bf16.msra.mxu0 0
    %741 = vmatprep.subr.bf16.mxu0 0
    %742 = vmatpush1.bf16.msra.mxu0 0
    %743 = vmatprep.subr.bf16.mxu0 0
    %744 = vmatpush1.bf16.msra.mxu0 0
    %745 = vmatprep.subr.bf16.mxu0 0
    %746 = vmatpush1.bf16.msra.mxu0 0
    %747 = vmatprep.subr.bf16.mxu0 0
    %748 = vmatpush1.bf16.msra.mxu0 0
    %749 = vmatprep.subr.bf16.mxu0 0
    %750 = vmatpush1.bf16.msra.mxu0 0
    %751 = vmatprep.subr.bf16.mxu0 0
    %752 = vmatpush1.bf16.msra.mxu0 0
    %753 = vmatprep.subr.bf16.mxu0 0
    %754 = vmatpush1.bf16.msra.mxu0 0
    %755 = vmatprep.mubr.bf16.mxu0 0
    %756 = vmatmul.mubr.bf16.gmra.mrb[0].mxu0 %v718
    %v757 = vpop.f32.mrb[0].mxu0
    %v758 = vadd.f32 0.0, %v757
    %v759 = vpop.f32.mrb[0].mxu0
    %v760 = vpop.f32.mrb[0].mxu0
    %v761 = vpop.f32.mrb[0].mxu0
    %762 = vdwg.mxu0
    %v764 = vsel %vm209, %v716, 0
    %v767 = vsel %vm329, %v600, 0
    %769 = vmatprep.subr.bf16.mxu0 0
    %770 = vmatpush1.bf16.msra.mxu0 %v767
    %771 = vmatprep.subr.bf16.mxu0 0
    %772 = vmatpush1.bf16.msra.mxu0 0
    %773 = vmatprep.subr.bf16.mxu0 0
    %774 = vmatpush1.bf16.msra.mxu0 0
    %775 = vmatprep.subr.bf16.mxu0 0
    %776 = vmatpush1.bf16.msra.mxu0 0
    %777 = vmatprep.subr.bf16.mxu0 0
    %778 = vmatpush1.bf16.msra.mxu0 0
    %779 = vmatprep.subr.bf16.mxu0 0
    %780 = vmatpush1.bf16.msra.mxu0 0
    %781 = vmatprep.subr.bf16.mxu0 0
    %782 = vmatpush1.bf16.msra.mxu0 0
    %783 = vmatprep.subr.bf16.mxu0 0
    %784 = vmatpush1.bf16.msra.mxu0 0
    %785 = vmatprep.subr.bf16.mxu0 0
    %786 = vmatpush1.bf16.msra.mxu0 0
    %787 = vmatprep.subr.bf16.mxu0 0
    %788 = vmatpush1.bf16.msra.mxu0 0
    %789 = vmatprep.subr.bf16.mxu0 0
    %790 = vmatpush1.bf16.msra.mxu0 0
    %791 = vmatprep.subr.bf16.mxu0 0
    %792 = vmatpush1.bf16.msra.mxu0 0
    %793 = vmatprep.subr.bf16.mxu0 0
    %794 = vmatpush1.bf16.msra.mxu0 0
    %795 = vmatprep.subr.bf16.mxu0 0
    %796 = vmatpush1.bf16.msra.mxu0 0
    %797 = vmatprep.subr.bf16.mxu0 0
    %798 = vmatpush1.bf16.msra.mxu0 0
    %799 = vmatprep.subr.bf16.mxu0 0
    %800 = vmatpush1.bf16.msra.mxu0 0
    %801 = vmatprep.mubr.bf16.mxu0 0
    %802 = vmatmul.mubr.bf16.gmra.mrb[0].mxu0 %v764
    %v803 = vpop.f32.mrb[0].mxu0
    %v804 = vadd.f32 0.0, %v803
    %v805 = vpop.f32.mrb[0].mxu0
    %v806 = vpop.f32.mrb[0].mxu0
    %v807 = vpop.f32.mrb[0].mxu0
    %808 = vdwg.mxu0
    %v809 = vpack.c.bf16 %v804, %v758
    %s810 = scalar_lea.vmem %s4, 4
    %v811 = vld [vmem:[%s810] sm:$0xf]
    %v813 = vsel %vm209, %v809, 0
    %v816 = vsel %vm329, %v811, 0
    %818 = vmatprep.subr.bf16.mxu0 0
    %819 = vmatpush1.bf16.msra.mxu0 %v816
    %820 = vmatprep.subr.bf16.mxu0 0
    %821 = vmatpush1.bf16.msra.mxu0 0
    %822 = vmatprep.subr.bf16.mxu0 0
    %823 = vmatpush1.bf16.msra.mxu0 0
    %824 = vmatprep.subr.bf16.mxu0 0
    %825 = vmatpush1.bf16.msra.mxu0 0
    %826 = vmatprep.subr.bf16.mxu0 0
    %827 = vmatpush1.bf16.msra.mxu0 0
    %828 = vmatprep.subr.bf16.mxu0 0
    %829 = vmatpush1.bf16.msra.mxu0 0
    %830 = vmatprep.subr.bf16.mxu0 0
    %831 = vmatpush1.bf16.msra.mxu0 0
    %832 = vmatprep.subr.bf16.mxu0 0
    %833 = vmatpush1.bf16.msra.mxu0 0
    %834 = vmatprep.subr.bf16.mxu0 0
    %835 = vmatpush1.bf16.msra.mxu0 0
    %836 = vmatprep.subr.bf16.mxu0 0
    %837 = vmatpush1.bf16.msra.mxu0 0
    %838 = vmatprep.subr.bf16.mxu0 0
    %839 = vmatpush1.bf16.msra.mxu0 0
    %840 = vmatprep.subr.bf16.mxu0 0
    %841 = vmatpush1.bf16.msra.mxu0 0
    %842 = vmatprep.subr.bf16.mxu0 0
    %843 = vmatpush1.bf16.msra.mxu0 0
    %844 = vmatprep.subr.bf16.mxu0 0
    %845 = vmatpush1.bf16.msra.mxu0 0
    %846 = vmatprep.subr.bf16.mxu0 0
    %847 = vmatpush1.bf16.msra.mxu0 0
    %848 = vmatprep.subr.bf16.mxu0 0
    %849 = vmatpush1.bf16.msra.mxu0 0
    %850 = vmatprep.mubr.bf16.mxu0 0
    %851 = vmatmul.mubr.bf16.gmra.mrb[0].mxu0 %v813
    %v852 = vpop.f32.mrb[0].mxu0
    %v853 = vadd.f32 0.0, %v852
    %v854 = vpop.f32.mrb[0].mxu0
    %v855 = vpop.f32.mrb[0].mxu0
    %v856 = vadd.f32 0.0, %v855
    %v857 = vpop.f32.mrb[0].mxu0
    %858 = vdwg.mxu0
    %v860 = vsel %vm209, %v419, 0
    %v863 = vsel %vm329, %v420, 0
    %865 = vmatprep.subr.bf16.mxu0 0
    %866 = vmatpush1.bf16.msra.mxu0 %v863
    %867 = vmatprep.subr.bf16.mxu0 0
    %868 = vmatpush1.bf16.msra.mxu0 0
    %869 = vmatprep.subr.bf16.mxu0 0
    %870 = vmatpush1.bf16.msra.mxu0 0
    %871 = vmatprep.subr.bf16.mxu0 0
    %872 = vmatpush1.bf16.msra.mxu0 0
    %873 = vmatprep.subr.bf16.mxu0 0
    %874 = vmatpush1.bf16.msra.mxu0 0
    %875 = vmatprep.subr.bf16.mxu0 0
    %876 = vmatpush1.bf16.msra.mxu0 0
    %877 = vmatprep.subr.bf16.mxu0 0
    %878 = vmatpush1.bf16.msra.mxu0 0
    %879 = vmatprep.subr.bf16.mxu0 0
    %880 = vmatpush1.bf16.msra.mxu0 0
    %881 = vmatprep.subr.bf16.mxu0 0
    %882 = vmatpush1.bf16.msra.mxu0 0
    %883 = vmatprep.subr.bf16.mxu0 0
    %884 = vmatpush1.bf16.msra.mxu0 0
    %885 = vmatprep.subr.bf16.mxu0 0
    %886 = vmatpush1.bf16.msra.mxu0 0
    %887 = vmatprep.subr.bf16.mxu0 0
    %888 = vmatpush1.bf16.msra.mxu0 0
    %889 = vmatprep.subr.bf16.mxu0 0
    %890 = vmatpush1.bf16.msra.mxu0 0
    %891 = vmatprep.subr.bf16.mxu0 0
    %892 = vmatpush1.bf16.msra.mxu0 0
    %893 = vmatprep.subr.bf16.mxu0 0
    %894 = vmatpush1.bf16.msra.mxu0 0
    %895 = vmatprep.subr.bf16.mxu0 0
    %896 = vmatpush1.bf16.msra.mxu0 0
    %897 = vmatprep.mubr.bf16.mxu0 0
    %898 = vmatmul.mubr.bf16.gmra.mrb[0].mxu0 %v860
    %v899 = vpop.f32.mrb[0].mxu0
    %v900 = vadd.f32 %v853, %v899
    %v901 = vpop.f32.mrb[0].mxu0
    %v902 = vpop.f32.mrb[0].mxu0
    %v903 = vadd.f32 %v856, %v902
    %v904 = vpop.f32.mrb[0].mxu0
    %905 = vdwg.mxu0
    %s906 = scalar_lea.vmem %s1, 32
    %v907 = vld [vmem:[%s906] sm:$0xf]
    %v908 = vld [vmem:[%s906 + $0x4] sm:$0xf]
    %v909 = vld [vmem:[%s906 + $0x8] sm:$0xf]
    %v910 = vld [vmem:[%s906 + $0xc] sm:$0xf]
    %v915 = vunpack.c.l.b16 %v907
    %v916 = vunpack.c.l.b16 %v908
    %v917 = vunpack.c.l.b16 %v909
    %v918 = vunpack.c.l.b16 %v910
    %v919 = vpack.c.b16 %v916, %v915
    %v920 = vpack.c.b16 %v918, %v917
    %923 = vmatprep.subr.bf16.mxu0 0
    %924 = vmatpush1.bf16.msra.mxu0 %v919
    %925 = vmatprep.subr.bf16.mxu0 0
    %926 = vmatpush1.bf16.msra.mxu0 %v920
    %927 = vmatprep.subr.bf16.mxu0 0
    %928 = vmatpush1.bf16.msra.mxu0 0
    %929 = vmatprep.subr.bf16.mxu0 0
    %930 = vmatpush1.bf16.msra.mxu0 0
    %931 = vmatprep.subr.bf16.mxu0 0
    %932 = vmatpush1.bf16.msra.mxu0 0
    %933 = vmatprep.subr.bf16.mxu0 0
    %934 = vmatpush1.bf16.msra.mxu0 0
    %935 = vmatprep.subr.bf16.mxu0 0
    %936 = vmatpush1.bf16.msra.mxu0 0
    %937 = vmatprep.subr.bf16.mxu0 0
    %938 = vmatpush1.bf16.msra.mxu0 0
    %939 = vmatprep.subr.bf16.mxu0 0
    %940 = vmatpush1.bf16.msra.mxu0 0
    %941 = vmatprep.subr.bf16.mxu0 0
    %942 = vmatpush1.bf16.msra.mxu0 0
    %943 = vmatprep.subr.bf16.mxu0 0
    %944 = vmatpush1.bf16.msra.mxu0 0
    %945 = vmatprep.subr.bf16.mxu0 0
    %946 = vmatpush1.bf16.msra.mxu0 0
    %947 = vmatprep.subr.bf16.mxu0 0
    %948 = vmatpush1.bf16.msra.mxu0 0
    %949 = vmatprep.subr.bf16.mxu0 0
    %950 = vmatpush1.bf16.msra.mxu0 0
    %951 = vmatprep.subr.bf16.mxu0 0
    %952 = vmatpush1.bf16.msra.mxu0 0
    %953 = vmatprep.subr.bf16.mxu0 0
    %954 = vmatpush1.bf16.msra.mxu0 0
    %955 = vmatprep.mubr.bf16.mxu0 0
    %956 = vmatmul.mubr.bf16.gmra.mrb[0].mxu0 %v46
    %v957 = vpop.f32.mrb[0].mxu0
    %v958 = vadd.f32 0.0, %v957
    %v959 = vpop.f32.mrb[0].mxu0
    %v960 = vpop.f32.mrb[0].mxu0
    %v961 = vadd.f32 0.0, %v960
    %v962 = vpop.f32.mrb[0].mxu0
    %963 = vdwg.mxu0
    %s964 = scalar_lea.vmem %s2, 32
    %v965 = vld [vmem:[%s964] sm:$0xf]
    %v966 = vld [vmem:[%s964 + $0x4] sm:$0xf]
    %v967 = vld [vmem:[%s964 + $0x8] sm:$0xf]
    %v968 = vld [vmem:[%s964 + $0xc] sm:$0xf]
    %v973 = vunpack.c.l.b16 %v965
    %v974 = vunpack.c.l.b16 %v966
    %v975 = vunpack.c.l.b16 %v967
    %v976 = vunpack.c.l.b16 %v968
    %v977 = vpack.c.b16 %v974, %v973
    %v978 = vpack.c.b16 %v976, %v975
    %981 = vmatprep.subr.bf16.mxu0 0
    %982 = vmatpush1.bf16.msra.mxu0 %v977
    %983 = vmatprep.subr.bf16.mxu0 0
    %984 = vmatpush1.bf16.msra.mxu0 %v978
    %985 = vmatprep.subr.bf16.mxu0 0
    %986 = vmatpush1.bf16.msra.mxu0 0
    %987 = vmatprep.subr.bf16.mxu0 0
    %988 = vmatpush1.bf16.msra.mxu0 0
    %989 = vmatprep.subr.bf16.mxu0 0
    %990 = vmatpush1.bf16.msra.mxu0 0
    %991 = vmatprep.subr.bf16.mxu0 0
    %992 = vmatpush1.bf16.msra.mxu0 0
    %993 = vmatprep.subr.bf16.mxu0 0
    %994 = vmatpush1.bf16.msra.mxu0 0
    %995 = vmatprep.subr.bf16.mxu0 0
    %996 = vmatpush1.bf16.msra.mxu0 0
    %997 = vmatprep.subr.bf16.mxu0 0
    %998 = vmatpush1.bf16.msra.mxu0 0
    %999 = vmatprep.subr.bf16.mxu0 0
    %1000 = vmatpush1.bf16.msra.mxu0 0
    %1001 = vmatprep.subr.bf16.mxu0 0
    %1002 = vmatpush1.bf16.msra.mxu0 0
    %1003 = vmatprep.subr.bf16.mxu0 0
    %1004 = vmatpush1.bf16.msra.mxu0 0
    %1005 = vmatprep.subr.bf16.mxu0 0
    %1006 = vmatpush1.bf16.msra.mxu0 0
    %1007 = vmatprep.subr.bf16.mxu0 0
    %1008 = vmatpush1.bf16.msra.mxu0 0
    %1009 = vmatprep.subr.bf16.mxu0 0
    %1010 = vmatpush1.bf16.msra.mxu0 0
    %1011 = vmatprep.subr.bf16.mxu0 0
    %1012 = vmatpush1.bf16.msra.mxu0 0
    %1013 = vmatprep.mubr.bf16.mxu0 0
    %1014 = vmatmul.mubr.bf16.gmra.mrb[0].mxu0 %v46
    %v1015 = vpop.f32.mrb[0].mxu0
    %v1016 = vadd.f32 0.0, %v1015
    %v1017 = vpop.f32.mrb[0].mxu0
    %v1018 = vpop.f32.mrb[0].mxu0
    %v1019 = vadd.f32 0.0, %v1018
    %v1020 = vpop.f32.mrb[0].mxu0
    %1021 = vdwg.mxu0
    %s1022 = scalar_lea.vmem %s3, 32
    %v1023 = vld [vmem:[%s1022] sm:$0xf]
    %v1024 = vld [vmem:[%s1022 + $0x4] sm:$0xf]
    %v1025 = vld [vmem:[%s1022 + $0x8] sm:$0xf]
    %v1026 = vld [vmem:[%s1022 + $0xc] sm:$0xf]
    %v1031 = vunpack.c.l.b16 %v1023
    %v1032 = vunpack.c.l.b16 %v1024
    %v1033 = vunpack.c.l.b16 %v1025
    %v1034 = vunpack.c.l.b16 %v1026
    %v1035 = vpack.c.b16 %v1032, %v1031
    %v1036 = vpack.c.b16 %v1034, %v1033
    %1039 = vmatprep.subr.bf16.mxu0 0
    %1040 = vmatpush1.bf16.msra.mxu0 %v1035
    %1041 = vmatprep.subr.bf16.mxu0 0
    %1042 = vmatpush1.bf16.msra.mxu0 %v1036
    %1043 = vmatprep.subr.bf16.mxu0 0
    %1044 = vmatpush1.bf16.msra.mxu0 0
    %1045 = vmatprep.subr.bf16.mxu0 0
    %1046 = vmatpush1.bf16.msra.mxu0 0
    %1047 = vmatprep.subr.bf16.mxu0 0
    %1048 = vmatpush1.bf16.msra.mxu0 0
    %1049 = vmatprep.subr.bf16.mxu0 0
    %1050 = vmatpush1.bf16.msra.mxu0 0
    %1051 = vmatprep.subr.bf16.mxu0 0
    %1052 = vmatpush1.bf16.msra.mxu0 0
    %1053 = vmatprep.subr.bf16.mxu0 0
    %1054 = vmatpush1.bf16.msra.mxu0 0
    %1055 = vmatprep.subr.bf16.mxu0 0
    %1056 = vmatpush1.bf16.msra.mxu0 0
    %1057 = vmatprep.subr.bf16.mxu0 0
    %1058 = vmatpush1.bf16.msra.mxu0 0
    %1059 = vmatprep.subr.bf16.mxu0 0
    %1060 = vmatpush1.bf16.msra.mxu0 0
    %1061 = vmatprep.subr.bf16.mxu0 0
    %1062 = vmatpush1.bf16.msra.mxu0 0
    %1063 = vmatprep.subr.bf16.mxu0 0
    %1064 = vmatpush1.bf16.msra.mxu0 0
    %1065 = vmatprep.subr.bf16.mxu0 0
    %1066 = vmatpush1.bf16.msra.mxu0 0
    %1067 = vmatprep.subr.bf16.mxu0 0
    %1068 = vmatpush1.bf16.msra.mxu0 0
    %1069 = vmatprep.subr.bf16.mxu0 0
    %1070 = vmatpush1.bf16.msra.mxu0 0
    %1071 = vmatprep.mubr.bf16.mxu0 0
    %1072 = vmatmul.mubr.bf16.gmra.mrb[0].mxu0 %v46
    %v1073 = vpop.f32.mrb[0].mxu0
    %v1074 = vadd.f32 0.0, %v1073
    %v1075 = vpop.f32.mrb[0].mxu0
    %v1076 = vpop.f32.mrb[0].mxu0
    %v1077 = vadd.f32 0.0, %v1076
    %v1078 = vpop.f32.mrb[0].mxu0
    %1079 = vdwg.mxu0
    %v1080 = vpack.c.bf16 %v958, %v958
    %v1081 = vpack.c.bf16 %v961, %v961
    %v1082 = vpack.c.bf16 %v1016, %v1016
    %v1083 = vpack.c.bf16 %v1019, %v1019
    %v1084 = vpack.c.bf16 %v1074, %v1074
    %v1085 = vpack.c.bf16 %v1077, %v1077
    %v1087 = vsel %vm209, %v1080, 0
    %v1090 = vsel %vm209, %v1082, 0
    %1092 = vmatprep.subr.bf16.mxu0 0
    %1093 = vmatpush1.bf16.xpose.msra.mxu0 %v1090
    %1094 = vmatprep.subr.bf16.mxu0 0
    %1095 = vmatpush1.bf16.xpose.msra.mxu0 0
    %1096 = vmatprep.subr.bf16.mxu0 0
    %1097 = vmatpush1.bf16.xpose.msra.mxu0 0
    %1098 = vmatprep.subr.bf16.mxu0 0
    %1099 = vmatpush1.bf16.xpose.msra.mxu0 0
    %1100 = vmatprep.subr.bf16.mxu0 0
    %1101 = vmatpush1.bf16.xpose.msra.mxu0 0
    %1102 = vmatprep.subr.bf16.mxu0 0
    %1103 = vmatpush1.bf16.xpose.msra.mxu0 0
    %1104 = vmatprep.subr.bf16.mxu0 0
    %1105 = vmatpush1.bf16.xpose.msra.mxu0 0
    %1106 = vmatprep.subr.bf16.mxu0 0
    %1107 = vmatpush1.bf16.xpose.msra.mxu0 0
    %1108 = vmatprep.subr.bf16.mxu0 0
    %1109 = vmatpush1.bf16.xpose.msra.mxu0 0
    %1110 = vmatprep.subr.bf16.mxu0 0
    %1111 = vmatpush1.bf16.xpose.msra.mxu0 0
    %1112 = vmatprep.subr.bf16.mxu0 0
    %1113 = vmatpush1.bf16.xpose.msra.mxu0 0
    %1114 = vmatprep.subr.bf16.mxu0 0
    %1115 = vmatpush1.bf16.xpose.msra.mxu0 0
    %1116 = vmatprep.subr.bf16.mxu0 0
    %1117 = vmatpush1.bf16.xpose.msra.mxu0 0
    %1118 = vmatprep.subr.bf16.mxu0 0
    %1119 = vmatpush1.bf16.xpose.msra.mxu0 0
    %1120 = vmatprep.subr.bf16.mxu0 0
    %1121 = vmatpush1.bf16.xpose.msra.mxu0 0
    %1122 = vmatprep.subr.bf16.mxu0 0
    %1123 = vmatpush1.bf16.xpose.msra.mxu0 0
    %1124 = vmatprep.mubr.bf16.mxu0 0
    %1125 = vmatmul.mubr.bf16.gmra.mrb[0].mxu0 %v1087
    %v1126 = vpop.f32.mrb[0].mxu0
    %v1127 = vadd.f32 0.0, %v1126
    %v1128 = vpop.f32.mrb[0].mxu0
    %v1129 = vpop.f32.mrb[0].mxu0
    %v1130 = vpop.f32.mrb[0].mxu0
    %1131 = vdwg.mxu0
    %v1133 = vsel %vm209, %v1081, 0
    %v1136 = vsel %vm209, %v1083, 0
    %1138 = vmatprep.subr.bf16.mxu0 0
    %1139 = vmatpush1.bf16.xpose.msra.mxu0 %v1136
    %1140 = vmatprep.subr.bf16.mxu0 0
    %1141 = vmatpush1.bf16.xpose.msra.mxu0 0
    %1142 = vmatprep.subr.bf16.mxu0 0
    %1143 = vmatpush1.bf16.xpose.msra.mxu0 0
    %1144 = vmatprep.subr.bf16.mxu0 0
    %1145 = vmatpush1.bf16.xpose.msra.mxu0 0
    %1146 = vmatprep.subr.bf16.mxu0 0
    %1147 = vmatpush1.bf16.xpose.msra.mxu0 0
    %1148 = vmatprep.subr.bf16.mxu0 0
    %1149 = vmatpush1.bf16.xpose.msra.mxu0 0
    %1150 = vmatprep.subr.bf16.mxu0 0
    %1151 = vmatpush1.bf16.xpose.msra.mxu0 0
    %1152 = vmatprep.subr.bf16.mxu0 0
    %1153 = vmatpush1.bf16.xpose.msra.mxu0 0
    %1154 = vmatprep.subr.bf16.mxu0 0
    %1155 = vmatpush1.bf16.xpose.msra.mxu0 0
    %1156 = vmatprep.subr.bf16.mxu0 0
    %1157 = vmatpush1.bf16.xpose.msra.mxu0 0
    %1158 = vmatprep.subr.bf16.mxu0 0
    %1159 = vmatpush1.bf16.xpose.msra.mxu0 0
    %1160 = vmatprep.subr.bf16.mxu0 0
    %1161 = vmatpush1.bf16.xpose.msra.mxu0 0
    %1162 = vmatprep.subr.bf16.mxu0 0
    %1163 = vmatpush1.bf16.xpose.msra.mxu0 0
    %1164 = vmatprep.subr.bf16.mxu0 0
    %1165 = vmatpush1.bf16.xpose.msra.mxu0 0
    %1166 = vmatprep.subr.bf16.mxu0 0
    %1167 = vmatpush1.bf16.xpose.msra.mxu0 0
    %1168 = vmatprep.subr.bf16.mxu0 0
    %1169 = vmatpush1.bf16.xpose.msra.mxu0 0
    %1170 = vmatprep.mubr.bf16.mxu0 0
    %1171 = vmatmul.mubr.bf16.gmra.mrb[0].mxu0 %v1133
    %v1172 = vpop.f32.mrb[0].mxu0
    %v1173 = vadd.f32 0.0, %v1172
    %v1174 = vpop.f32.mrb[0].mxu0
    %v1175 = vpop.f32.mrb[0].mxu0
    %v1176 = vpop.f32.mrb[0].mxu0
    %1177 = vdwg.mxu0
    %v1178 = vsel %vm209, %v1127, -inf
    %1179 = vmax.xlane.f32.xlu0 %v1178
    %v1180 = vpop.xlane.xlu0 %1179
    %v1181 = vsel %vm209, %v1173, -inf
    %1182 = vmax.xlane.f32.xlu0 %v1181
    %v1183 = vpop.xlane.xlu0 %1182
    %v1184 = vsub.f32 %v1127, %v1180
    %v1185 = vsub.f32 %v1173, %v1183
    %v1186 = vmul.f32 %v1184, 1.442695
    %v1187 = vpow.pop %v1186
    %v1188 = vmul.f32 %v1185, 1.442695
    %v1189 = vpow.pop %v1188
    %v1190 = vsel %vm209, %v1187, 0.0
    %1191 = vadd.xlane.f32.xlu0 %v1190
    %v1192 = vpop.xlane.xlu0 %1191
    %v1193 = vsel %vm209, %v1189, 0.0
    %1194 = vadd.xlane.f32.xlu0 %v1193
    %v1195 = vpop.xlane.xlu0 %1194
    %v1196 = vrcp.pop %v1192
    %v1197 = vrcp.pop %v1195
    %v1198 = vmul.f32 %v1187, %v1196
    %v1199 = vmul.f32 %v1189, %v1197
    %v1200 = vpack.c.bf16 %v1198, %v1198
    %v1201 = vpack.c.bf16 %v1199, %v1199
    %v1203 = vsel %vm209, %v1200, 0
    %v1206 = vsel %vm329, %v1084, 0
    %1208 = vmatprep.subr.bf16.mxu0 0
    %1209 = vmatpush1.bf16.msra.mxu0 %v1206
    %1210 = vmatprep.subr.bf16.mxu0 0
    %1211 = vmatpush1.bf16.msra.mxu0 0
    %1212 = vmatprep.subr.bf16.mxu0 0
    %1213 = vmatpush1.bf16.msra.mxu0 0
    %1214 = vmatprep.subr.bf16.mxu0 0
    %1215 = vmatpush1.bf16.msra.mxu0 0
    %1216 = vmatprep.subr.bf16.mxu0 0
    %1217 = vmatpush1.bf16.msra.mxu0 0
    %1218 = vmatprep.subr.bf16.mxu0 0
    %1219 = vmatpush1.bf16.msra.mxu0 0
    %1220 = vmatprep.subr.bf16.mxu0 0
    %1221 = vmatpush1.bf16.msra.mxu0 0
    %1222 = vmatprep.subr.bf16.mxu0 0
    %1223 = vmatpush1.bf16.msra.mxu0 0
    %1224 = vmatprep.subr.bf16.mxu0 0
    %1225 = vmatpush1.bf16.msra.mxu0 0
    %1226 = vmatprep.subr.bf16.mxu0 0
    %1227 = vmatpush1.bf16.msra.mxu0 0
    %1228 = vmatprep.subr.bf16.mxu0 0
    %1229 = vmatpush1.bf16.msra.mxu0 0
    %1230 = vmatprep.subr.bf16.mxu0 0
    %1231 = vmatpush1.bf16.msra.mxu0 0
    %1232 = vmatprep.subr.bf16.mxu0 0
    %1233 = vmatpush1.bf16.msra.mxu0 0
    %1234 = vmatprep.subr.bf16.mxu0 0
    %1235 = vmatpush1.bf16.msra.mxu0 0
    %1236 = vmatprep.subr.bf16.mxu0 0
    %1237 = vmatpush1.bf16.msra.mxu0 0
    %1238 = vmatprep.subr.bf16.mxu0 0
    %1239 = vmatpush1.bf16.msra.mxu0 0
    %1240 = vmatprep.mubr.bf16.mxu0 0
    %1241 = vmatmul.mubr.bf16.gmra.mrb[0].mxu0 %v1203
    %v1242 = vpop.f32.mrb[0].mxu0
    %v1243 = vadd.f32 0.0, %v1242
    %v1244 = vpop.f32.mrb[0].mxu0
    %v1245 = vpop.f32.mrb[0].mxu0
    %v1246 = vpop.f32.mrb[0].mxu0
    %1247 = vdwg.mxu0
    %v1249 = vsel %vm209, %v1201, 0
    %v1252 = vsel %vm329, %v1085, 0
    %1254 = vmatprep.subr.bf16.mxu0 0
    %1255 = vmatpush1.bf16.msra.mxu0 %v1252
    %1256 = vmatprep.subr.bf16.mxu0 0
    %1257 = vmatpush1.bf16.msra.mxu0 0
    %1258 = vmatprep.subr.bf16.mxu0 0
    %1259 = vmatpush1.bf16.msra.mxu0 0
    %1260 = vmatprep.subr.bf16.mxu0 0
    %1261 = vmatpush1.bf16.msra.mxu0 0
    %1262 = vmatprep.subr.bf16.mxu0 0
    %1263 = vmatpush1.bf16.msra.mxu0 0
    %1264 = vmatprep.subr.bf16.mxu0 0
    %1265 = vmatpush1.bf16.msra.mxu0 0
    %1266 = vmatprep.subr.bf16.mxu0 0
    %1267 = vmatpush1.bf16.msra.mxu0 0
    %1268 = vmatprep.subr.bf16.mxu0 0
    %1269 = vmatpush1.bf16.msra.mxu0 0
    %1270 = vmatprep.subr.bf16.mxu0 0
    %1271 = vmatpush1.bf16.msra.mxu0 0
    %1272 = vmatprep.subr.bf16.mxu0 0
    %1273 = vmatpush1.bf16.msra.mxu0 0
    %1274 = vmatprep.subr.bf16.mxu0 0
    %1275 = vmatpush1.bf16.msra.mxu0 0
    %1276 = vmatprep.subr.bf16.mxu0 0
    %1277 = vmatpush1.bf16.msra.mxu0 0
    %1278 = vmatprep.subr.bf16.mxu0 0
    %1279 = vmatpush1.bf16.msra.mxu0 0
    %1280 = vmatprep.subr.bf16.mxu0 0
    %1281 = vmatpush1.bf16.msra.mxu0 0
    %1282 = vmatprep.subr.bf16.mxu0 0
    %1283 = vmatpush1.bf16.msra.mxu0 0
    %1284 = vmatprep.subr.bf16.mxu0 0
    %1285 = vmatpush1.bf16.msra.mxu0 0
    %1286 = vmatprep.mubr.bf16.mxu0 0
    %1287 = vmatmul.mubr.bf16.gmra.mrb[0].mxu0 %v1249
    %v1288 = vpop.f32.mrb[0].mxu0
    %v1289 = vadd.f32 0.0, %v1288
    %v1290 = vpop.f32.mrb[0].mxu0
    %v1291 = vpop.f32.mrb[0].mxu0
    %v1292 = vpop.f32.mrb[0].mxu0
    %1293 = vdwg.mxu0
    %v1294 = vpack.c.bf16 %v1289, %v1243
    %s1295 = scalar_lea.vmem %s4, 8
    %v1296 = vld [vmem:[%s1295] sm:$0xf]
    %v1298 = vsel %vm209, %v1294, 0
    %v1301 = vsel %vm329, %v1296, 0
    %1303 = vmatprep.subr.bf16.mxu0 0
    %1304 = vmatpush1.bf16.msra.mxu0 %v1301
    %1305 = vmatprep.subr.bf16.mxu0 0
    %1306 = vmatpush1.bf16.msra.mxu0 0
    %1307 = vmatprep.subr.bf16.mxu0 0
    %1308 = vmatpush1.bf16.msra.mxu0 0
    %1309 = vmatprep.subr.bf16.mxu0 0
    %1310 = vmatpush1.bf16.msra.mxu0 0
    %1311 = vmatprep.subr.bf16.mxu0 0
    %1312 = vmatpush1.bf16.msra.mxu0 0
    %1313 = vmatprep.subr.bf16.mxu0 0
    %1314 = vmatpush1.bf16.msra.mxu0 0
    %1315 = vmatprep.subr.bf16.mxu0 0
    %1316 = vmatpush1.bf16.msra.mxu0 0
    %1317 = vmatprep.subr.bf16.mxu0 0
    %1318 = vmatpush1.bf16.msra.mxu0 0
    %1319 = vmatprep.subr.bf16.mxu0 0
    %1320 = vmatpush1.bf16.msra.mxu0 0
    %1321 = vmatprep.subr.bf16.mxu0 0
    %1322 = vmatpush1.bf16.msra.mxu0 0
    %1323 = vmatprep.subr.bf16.mxu0 0
    %1324 = vmatpush1.bf16.msra.mxu0 0
    %1325 = vmatprep.subr.bf16.mxu0 0
    %1326 = vmatpush1.bf16.msra.mxu0 0
    %1327 = vmatprep.subr.bf16.mxu0 0
    %1328 = vmatpush1.bf16.msra.mxu0 0
    %1329 = vmatprep.subr.bf16.mxu0 0
    %1330 = vmatpush1.bf16.msra.mxu0 0
    %1331 = vmatprep.subr.bf16.mxu0 0
    %1332 = vmatpush1.bf16.msra.mxu0 0
    %1333 = vmatprep.subr.bf16.mxu0 0
    %1334 = vmatpush1.bf16.msra.mxu0 0
    %1335 = vmatprep.mubr.bf16.mxu0 0
    %1336 = vmatmul.mubr.bf16.gmra.mrb[0].mxu0 %v1298
    %v1337 = vpop.f32.mrb[0].mxu0
    %v1338 = vadd.f32 0.0, %v1337
    %v1339 = vpop.f32.mrb[0].mxu0
    %v1340 = vpop.f32.mrb[0].mxu0
    %v1341 = vadd.f32 0.0, %v1340
    %v1342 = vpop.f32.mrb[0].mxu0
    %1343 = vdwg.mxu0
    %v1344 = vadd.f32 %v900, %v1338
    %v1345 = vadd.f32 %v903, %v1341
    %s1346 = scalar_lea.vmem %s1, 48
    %v1347 = vld [vmem:[%s1346] sm:$0xf]
    %v1348 = vld [vmem:[%s1346 + $0x4] sm:$0xf]
    %v1349 = vld [vmem:[%s1346 + $0x8] sm:$0xf]
    %v1350 = vld [vmem:[%s1346 + $0xc] sm:$0xf]
    %v1355 = vunpack.c.l.b16 %v1347
    %v1356 = vunpack.c.l.b16 %v1348
    %v1357 = vunpack.c.l.b16 %v1349
    %v1358 = vunpack.c.l.b16 %v1350
    %v1359 = vpack.c.b16 %v1356, %v1355
    %v1360 = vpack.c.b16 %v1358, %v1357
    %1363 = vmatprep.subr.bf16.mxu0 0
    %1364 = vmatpush1.bf16.msra.mxu0 %v1359
    %1365 = vmatprep.subr.bf16.mxu0 0
    %1366 = vmatpush1.bf16.msra.mxu0 %v1360
    %1367 = vmatprep.subr.bf16.mxu0 0
    %1368 = vmatpush1.bf16.msra.mxu0 0
    %1369 = vmatprep.subr.bf16.mxu0 0
    %1370 = vmatpush1.bf16.msra.mxu0 0
    %1371 = vmatprep.subr.bf16.mxu0 0
    %1372 = vmatpush1.bf16.msra.mxu0 0
    %1373 = vmatprep.subr.bf16.mxu0 0
    %1374 = vmatpush1.bf16.msra.mxu0 0
    %1375 = vmatprep.subr.bf16.mxu0 0
    %1376 = vmatpush1.bf16.msra.mxu0 0
    %1377 = vmatprep.subr.bf16.mxu0 0
    %1378 = vmatpush1.bf16.msra.mxu0 0
    %1379 = vmatprep.subr.bf16.mxu0 0
    %1380 = vmatpush1.bf16.msra.mxu0 0
    %1381 = vmatprep.subr.bf16.mxu0 0
    %1382 = vmatpush1.bf16.msra.mxu0 0
    %1383 = vmatprep.subr.bf16.mxu0 0
    %1384 = vmatpush1.bf16.msra.mxu0 0
    %1385 = vmatprep.subr.bf16.mxu0 0
    %1386 = vmatpush1.bf16.msra.mxu0 0
    %1387 = vmatprep.subr.bf16.mxu0 0
    %1388 = vmatpush1.bf16.msra.mxu0 0
    %1389 = vmatprep.subr.bf16.mxu0 0
    %1390 = vmatpush1.bf16.msra.mxu0 0
    %1391 = vmatprep.subr.bf16.mxu0 0
    %1392 = vmatpush1.bf16.msra.mxu0 0
    %1393 = vmatprep.subr.bf16.mxu0 0
    %1394 = vmatpush1.bf16.msra.mxu0 0
    %1395 = vmatprep.mubr.bf16.mxu0 0
    %1396 = vmatmul.mubr.bf16.gmra.mrb[0].mxu0 %v46
    %v1397 = vpop.f32.mrb[0].mxu0
    %v1398 = vadd.f32 0.0, %v1397
    %v1399 = vpop.f32.mrb[0].mxu0
    %v1400 = vpop.f32.mrb[0].mxu0
    %v1401 = vadd.f32 0.0, %v1400
    %v1402 = vpop.f32.mrb[0].mxu0
    %1403 = vdwg.mxu0
    %s1404 = scalar_lea.vmem %s2, 48
    %v1405 = vld [vmem:[%s1404] sm:$0xf]
    %v1406 = vld [vmem:[%s1404 + $0x4] sm:$0xf]
    %v1407 = vld [vmem:[%s1404 + $0x8] sm:$0xf]
    %v1408 = vld [vmem:[%s1404 + $0xc] sm:$0xf]
    %v1413 = vunpack.c.l.b16 %v1405
    %v1414 = vunpack.c.l.b16 %v1406
    %v1415 = vunpack.c.l.b16 %v1407
    %v1416 = vunpack.c.l.b16 %v1408
    %v1417 = vpack.c.b16 %v1414, %v1413
    %v1418 = vpack.c.b16 %v1416, %v1415
    %1421 = vmatprep.subr.bf16.mxu0 0
    %1422 = vmatpush1.bf16.msra.mxu0 %v1417
    %1423 = vmatprep.subr.bf16.mxu0 0
    %1424 = vmatpush1.bf16.msra.mxu0 %v1418
    %1425 = vmatprep.subr.bf16.mxu0 0
    %1426 = vmatpush1.bf16.msra.mxu0 0
    %1427 = vmatprep.subr.bf16.mxu0 0
    %1428 = vmatpush1.bf16.msra.mxu0 0
    %1429 = vmatprep.subr.bf16.mxu0 0
    %1430 = vmatpush1.bf16.msra.mxu0 0
    %1431 = vmatprep.subr.bf16.mxu0 0
    %1432 = vmatpush1.bf16.msra.mxu0 0
    %1433 = vmatprep.subr.bf16.mxu0 0
    %1434 = vmatpush1.bf16.msra.mxu0 0
    %1435 = vmatprep.subr.bf16.mxu0 0
    %1436 = vmatpush1.bf16.msra.mxu0 0
    %1437 = vmatprep.subr.bf16.mxu0 0
    %1438 = vmatpush1.bf16.msra.mxu0 0
    %1439 = vmatprep.subr.bf16.mxu0 0
    %1440 = vmatpush1.bf16.msra.mxu0 0
    %1441 = vmatprep.subr.bf16.mxu0 0
    %1442 = vmatpush1.bf16.msra.mxu0 0
    %1443 = vmatprep.subr.bf16.mxu0 0
    %1444 = vmatpush1.bf16.msra.mxu0 0
    %1445 = vmatprep.subr.bf16.mxu0 0
    %1446 = vmatpush1.bf16.msra.mxu0 0
    %1447 = vmatprep.subr.bf16.mxu0 0
    %1448 = vmatpush1.bf16.msra.mxu0 0
    %1449 = vmatprep.subr.bf16.mxu0 0
    %1450 = vmatpush1.bf16.msra.mxu0 0
    %1451 = vmatprep.subr.bf16.mxu0 0
    %1452 = vmatpush1.bf16.msra.mxu0 0
    %1453 = vmatprep.mubr.bf16.mxu0 0
    %1454 = vmatmul.mubr.bf16.gmra.mrb[0].mxu0 %v46
    %v1455 = vpop.f32.mrb[0].mxu0
    %v1456 = vadd.f32 0.0, %v1455
    %v1457 = vpop.f32.mrb[0].mxu0
    %v1458 = vpop.f32.mrb[0].mxu0
    %v1459 = vadd.f32 0.0, %v1458
    %v1460 = vpop.f32.mrb[0].mxu0
    %1461 = vdwg.mxu0
    %s1462 = scalar_lea.vmem %s3, 48
    %v1463 = vld [vmem:[%s1462] sm:$0xf]
    %v1464 = vld [vmem:[%s1462 + $0x4] sm:$0xf]
    %v1465 = vld [vmem:[%s1462 + $0x8] sm:$0xf]
    %v1466 = vld [vmem:[%s1462 + $0xc] sm:$0xf]
    %v1471 = vunpack.c.l.b16 %v1463
    %v1472 = vunpack.c.l.b16 %v1464
    %v1473 = vunpack.c.l.b16 %v1465
    %v1474 = vunpack.c.l.b16 %v1466
    %v1475 = vpack.c.b16 %v1472, %v1471
    %v1476 = vpack.c.b16 %v1474, %v1473
    %1479 = vmatprep.subr.bf16.mxu0 0
    %1480 = vmatpush1.bf16.msra.mxu0 %v1475
    %1481 = vmatprep.subr.bf16.mxu0 0
    %1482 = vmatpush1.bf16.msra.mxu0 %v1476
    %1483 = vmatprep.subr.bf16.mxu0 0
    %1484 = vmatpush1.bf16.msra.mxu0 0
    %1485 = vmatprep.subr.bf16.mxu0 0
    %1486 = vmatpush1.bf16.msra.mxu0 0
    %1487 = vmatprep.subr.bf16.mxu0 0
    %1488 = vmatpush1.bf16.msra.mxu0 0
    %1489 = vmatprep.subr.bf16.mxu0 0
    %1490 = vmatpush1.bf16.msra.mxu0 0
    %1491 = vmatprep.subr.bf16.mxu0 0
    %1492 = vmatpush1.bf16.msra.mxu0 0
    %1493 = vmatprep.subr.bf16.mxu0 0
    %1494 = vmatpush1.bf16.msra.mxu0 0
    %1495 = vmatprep.subr.bf16.mxu0 0
    %1496 = vmatpush1.bf16.msra.mxu0 0
    %1497 = vmatprep.subr.bf16.mxu0 0
    %1498 = vmatpush1.bf16.msra.mxu0 0
    %1499 = vmatprep.subr.bf16.mxu0 0
    %1500 = vmatpush1.bf16.msra.mxu0 0
    %1501 = vmatprep.subr.bf16.mxu0 0
    %1502 = vmatpush1.bf16.msra.mxu0 0
    %1503 = vmatprep.subr.bf16.mxu0 0
    %1504 = vmatpush1.bf16.msra.mxu0 0
    %1505 = vmatprep.subr.bf16.mxu0 0
    %1506 = vmatpush1.bf16.msra.mxu0 0
    %1507 = vmatprep.subr.bf16.mxu0 0
    %1508 = vmatpush1.bf16.msra.mxu0 0
    %1509 = vmatprep.subr.bf16.mxu0 0
    %1510 = vmatpush1.bf16.msra.mxu0 0
    %1511 = vmatprep.mubr.bf16.mxu0 0
    %1512 = vmatmul.mubr.bf16.gmra.mrb[0].mxu0 %v46
    %v1513 = vpop.f32.mrb[0].mxu0
    %v1514 = vadd.f32 0.0, %v1513
    %v1515 = vpop.f32.mrb[0].mxu0
    %v1516 = vpop.f32.mrb[0].mxu0
    %v1517 = vadd.f32 0.0, %v1516
    %v1518 = vpop.f32.mrb[0].mxu0
    %1519 = vdwg.mxu0
    %v1520 = vpack.c.bf16 %v1398, %v1398
    %v1521 = vpack.c.bf16 %v1401, %v1401
    %v1522 = vpack.c.bf16 %v1456, %v1456
    %v1523 = vpack.c.bf16 %v1459, %v1459
    %v1524 = vpack.c.bf16 %v1514, %v1514
    %v1525 = vpack.c.bf16 %v1517, %v1517
    %v1527 = vsel %vm209, %v1520, 0
    %v1530 = vsel %vm209, %v1522, 0
    %1532 = vmatprep.subr.bf16.mxu0 0
    %1533 = vmatpush1.bf16.xpose.msra.mxu0 %v1530
    %1534 = vmatprep.subr.bf16.mxu0 0
    %1535 = vmatpush1.bf16.xpose.msra.mxu0 0
    %1536 = vmatprep.subr.bf16.mxu0 0
    %1537 = vmatpush1.bf16.xpose.msra.mxu0 0
    %1538 = vmatprep.subr.bf16.mxu0 0
    %1539 = vmatpush1.bf16.xpose.msra.mxu0 0
    %1540 = vmatprep.subr.bf16.mxu0 0
    %1541 = vmatpush1.bf16.xpose.msra.mxu0 0
    %1542 = vmatprep.subr.bf16.mxu0 0
    %1543 = vmatpush1.bf16.xpose.msra.mxu0 0
    %1544 = vmatprep.subr.bf16.mxu0 0
    %1545 = vmatpush1.bf16.xpose.msra.mxu0 0
    %1546 = vmatprep.subr.bf16.mxu0 0
    %1547 = vmatpush1.bf16.xpose.msra.mxu0 0
    %1548 = vmatprep.subr.bf16.mxu0 0
    %1549 = vmatpush1.bf16.xpose.msra.mxu0 0
    %1550 = vmatprep.subr.bf16.mxu0 0
    %1551 = vmatpush1.bf16.xpose.msra.mxu0 0
    %1552 = vmatprep.subr.bf16.mxu0 0
    %1553 = vmatpush1.bf16.xpose.msra.mxu0 0
    %1554 = vmatprep.subr.bf16.mxu0 0
    %1555 = vmatpush1.bf16.xpose.msra.mxu0 0
    %1556 = vmatprep.subr.bf16.mxu0 0
    %1557 = vmatpush1.bf16.xpose.msra.mxu0 0
    %1558 = vmatprep.subr.bf16.mxu0 0
    %1559 = vmatpush1.bf16.xpose.msra.mxu0 0
    %1560 = vmatprep.subr.bf16.mxu0 0
    %1561 = vmatpush1.bf16.xpose.msra.mxu0 0
    %1562 = vmatprep.subr.bf16.mxu0 0
    %1563 = vmatpush1.bf16.xpose.msra.mxu0 0
    %1564 = vmatprep.mubr.bf16.mxu0 0
    %1565 = vmatmul.mubr.bf16.gmra.mrb[0].mxu0 %v1527
    %v1566 = vpop.f32.mrb[0].mxu0
    %v1567 = vadd.f32 0.0, %v1566
    %v1568 = vpop.f32.mrb[0].mxu0
    %v1569 = vpop.f32.mrb[0].mxu0
    %v1570 = vpop.f32.mrb[0].mxu0
    %1571 = vdwg.mxu0
    %v1573 = vsel %vm209, %v1521, 0
    %v1576 = vsel %vm209, %v1523, 0
    %1578 = vmatprep.subr.bf16.mxu0 0
    %1579 = vmatpush1.bf16.xpose.msra.mxu0 %v1576
    %1580 = vmatprep.subr.bf16.mxu0 0
    %1581 = vmatpush1.bf16.xpose.msra.mxu0 0
    %1582 = vmatprep.subr.bf16.mxu0 0
    %1583 = vmatpush1.bf16.xpose.msra.mxu0 0
    %1584 = vmatprep.subr.bf16.mxu0 0
    %1585 = vmatpush1.bf16.xpose.msra.mxu0 0
    %1586 = vmatprep.subr.bf16.mxu0 0
    %1587 = vmatpush1.bf16.xpose.msra.mxu0 0
    %1588 = vmatprep.subr.bf16.mxu0 0
    %1589 = vmatpush1.bf16.xpose.msra.mxu0 0
    %1590 = vmatprep.subr.bf16.mxu0 0
    %1591 = vmatpush1.bf16.xpose.msra.mxu0 0
    %1592 = vmatprep.subr.bf16.mxu0 0
    %1593 = vmatpush1.bf16.xpose.msra.mxu0 0
    %1594 = vmatprep.subr.bf16.mxu0 0
    %1595 = vmatpush1.bf16.xpose.msra.mxu0 0
    %1596 = vmatprep.subr.bf16.mxu0 0
    %1597 = vmatpush1.bf16.xpose.msra.mxu0 0
    %1598 = vmatprep.subr.bf16.mxu0 0
    %1599 = vmatpush1.bf16.xpose.msra.mxu0 0
    %1600 = vmatprep.subr.bf16.mxu0 0
    %1601 = vmatpush1.bf16.xpose.msra.mxu0 0
    %1602 = vmatprep.subr.bf16.mxu0 0
    %1603 = vmatpush1.bf16.xpose.msra.mxu0 0
    %1604 = vmatprep.subr.bf16.mxu0 0
    %1605 = vmatpush1.bf16.xpose.msra.mxu0 0
    %1606 = vmatprep.subr.bf16.mxu0 0
    %1607 = vmatpush1.bf16.xpose.msra.mxu0 0
    %1608 = vmatprep.subr.bf16.mxu0 0
    %1609 = vmatpush1.bf16.xpose.msra.mxu0 0
    %1610 = vmatprep.mubr.bf16.mxu0 0
    %1611 = vmatmul.mubr.bf16.gmra.mrb[0].mxu0 %v1573
    %v1612 = vpop.f32.mrb[0].mxu0
    %v1613 = vadd.f32 0.0, %v1612
    %v1614 = vpop.f32.mrb[0].mxu0
    %v1615 = vpop.f32.mrb[0].mxu0
    %v1616 = vpop.f32.mrb[0].mxu0
    %1617 = vdwg.mxu0
    %v1618 = vsel %vm209, %v1567, -inf
    %1619 = vmax.xlane.f32.xlu0 %v1618
    %v1620 = vpop.xlane.xlu0 %1619
    %v1621 = vsel %vm209, %v1613, -inf
    %1622 = vmax.xlane.f32.xlu0 %v1621
    %v1623 = vpop.xlane.xlu0 %1622
    %v1624 = vsub.f32 %v1567, %v1620
    %v1625 = vsub.f32 %v1613, %v1623
    %v1626 = vmul.f32 %v1624, 1.442695
    %v1627 = vpow.pop %v1626
    %v1628 = vmul.f32 %v1625, 1.442695
    %v1629 = vpow.pop %v1628
    %v1630 = vsel %vm209, %v1627, 0.0
    %1631 = vadd.xlane.f32.xlu0 %v1630
    %v1632 = vpop.xlane.xlu0 %1631
    %v1633 = vsel %vm209, %v1629, 0.0
    %1634 = vadd.xlane.f32.xlu0 %v1633
    %v1635 = vpop.xlane.xlu0 %1634
    %v1636 = vrcp.pop %v1632
    %v1637 = vrcp.pop %v1635
    %v1638 = vmul.f32 %v1627, %v1636
    %v1639 = vmul.f32 %v1629, %v1637
    %v1640 = vpack.c.bf16 %v1638, %v1638
    %v1641 = vpack.c.bf16 %v1639, %v1639
    %v1643 = vsel %vm209, %v1640, 0
    %v1646 = vsel %vm329, %v1524, 0
    %1648 = vmatprep.subr.bf16.mxu0 0
    %1649 = vmatpush1.bf16.msra.mxu0 %v1646
    %1650 = vmatprep.subr.bf16.mxu0 0
    %1651 = vmatpush1.bf16.msra.mxu0 0
    %1652 = vmatprep.subr.bf16.mxu0 0
    %1653 = vmatpush1.bf16.msra.mxu0 0
    %1654 = vmatprep.subr.bf16.mxu0 0
    %1655 = vmatpush1.bf16.msra.mxu0 0
    %1656 = vmatprep.subr.bf16.mxu0 0
    %1657 = vmatpush1.bf16.msra.mxu0 0
    %1658 = vmatprep.subr.bf16.mxu0 0
    %1659 = vmatpush1.bf16.msra.mxu0 0
    %1660 = vmatprep.subr.bf16.mxu0 0
    %1661 = vmatpush1.bf16.msra.mxu0 0
    %1662 = vmatprep.subr.bf16.mxu0 0
    %1663 = vmatpush1.bf16.msra.mxu0 0
    %1664 = vmatprep.subr.bf16.mxu0 0
    %1665 = vmatpush1.bf16.msra.mxu0 0
    %1666 = vmatprep.subr.bf16.mxu0 0
    %1667 = vmatpush1.bf16.msra.mxu0 0
    %1668 = vmatprep.subr.bf16.mxu0 0
    %1669 = vmatpush1.bf16.msra.mxu0 0
    %1670 = vmatprep.subr.bf16.mxu0 0
    %1671 = vmatpush1.bf16.msra.mxu0 0
    %1672 = vmatprep.subr.bf16.mxu0 0
    %1673 = vmatpush1.bf16.msra.mxu0 0
    %1674 = vmatprep.subr.bf16.mxu0 0
    %1675 = vmatpush1.bf16.msra.mxu0 0
    %1676 = vmatprep.subr.bf16.mxu0 0
    %1677 = vmatpush1.bf16.msra.mxu0 0
    %1678 = vmatprep.subr.bf16.mxu0 0
    %1679 = vmatpush1.bf16.msra.mxu0 0
    %1680 = vmatprep.mubr.bf16.mxu0 0
    %1681 = vmatmul.mubr.bf16.gmra.mrb[0].mxu0 %v1643
    %v1682 = vpop.f32.mrb[0].mxu0
    %v1683 = vadd.f32 0.0, %v1682
    %v1684 = vpop.f32.mrb[0].mxu0
    %v1685 = vpop.f32.mrb[0].mxu0
    %v1686 = vpop.f32.mrb[0].mxu0
    %1687 = vdwg.mxu0
    %v1689 = vsel %vm209, %v1641, 0
    %v1692 = vsel %vm329, %v1525, 0
    %1694 = vmatprep.subr.bf16.mxu0 0
    %1695 = vmatpush1.bf16.msra.mxu0 %v1692
    %1696 = vmatprep.subr.bf16.mxu0 0
    %1697 = vmatpush1.bf16.msra.mxu0 0
    %1698 = vmatprep.subr.bf16.mxu0 0
    %1699 = vmatpush1.bf16.msra.mxu0 0
    %1700 = vmatprep.subr.bf16.mxu0 0
    %1701 = vmatpush1.bf16.msra.mxu0 0
    %1702 = vmatprep.subr.bf16.mxu0 0
    %1703 = vmatpush1.bf16.msra.mxu0 0
    %1704 = vmatprep.subr.bf16.mxu0 0
    %1705 = vmatpush1.bf16.msra.mxu0 0
    %1706 = vmatprep.subr.bf16.mxu0 0
    %1707 = vmatpush1.bf16.msra.mxu0 0
    %1708 = vmatprep.subr.bf16.mxu0 0
    %1709 = vmatpush1.bf16.msra.mxu0 0
    %1710 = vmatprep.subr.bf16.mxu0 0
    %1711 = vmatpush1.bf16.msra.mxu0 0
    %1712 = vmatprep.subr.bf16.mxu0 0
    %1713 = vmatpush1.bf16.msra.mxu0 0
    %1714 = vmatprep.subr.bf16.mxu0 0
    %1715 = vmatpush1.bf16.msra.mxu0 0
    %1716 = vmatprep.subr.bf16.mxu0 0
    %1717 = vmatpush1.bf16.msra.mxu0 0
    %1718 = vmatprep.subr.bf16.mxu0 0
    %1719 = vmatpush1.bf16.msra.mxu0 0
    %1720 = vmatprep.subr.bf16.mxu0 0
    %1721 = vmatpush1.bf16.msra.mxu0 0
    %1722 = vmatprep.subr.bf16.mxu0 0
    %1723 = vmatpush1.bf16.msra.mxu0 0
    %1724 = vmatprep.subr.bf16.mxu0 0
    %1725 = vmatpush1.bf16.msra.mxu0 0
    %1726 = vmatprep.mubr.bf16.mxu0 0
    %1727 = vmatmul.mubr.bf16.gmra.mrb[0].mxu0 %v1689
    %v1728 = vpop.f32.mrb[0].mxu0
    %v1729 = vadd.f32 0.0, %v1728
    %v1730 = vpop.f32.mrb[0].mxu0
    %v1731 = vpop.f32.mrb[0].mxu0
    %v1732 = vpop.f32.mrb[0].mxu0
    %1733 = vdwg.mxu0
    %v1734 = vpack.c.bf16 %v1729, %v1683
    %s1735 = scalar_lea.vmem %s4, 12
    %v1736 = vld [vmem:[%s1735] sm:$0xf]
    %v1738 = vsel %vm209, %v1734, 0
    %v1741 = vsel %vm329, %v1736, 0
    %1743 = vmatprep.subr.bf16.mxu0 0
    %1744 = vmatpush1.bf16.msra.mxu0 %v1741
    %1745 = vmatprep.subr.bf16.mxu0 0
    %1746 = vmatpush1.bf16.msra.mxu0 0
    %1747 = vmatprep.subr.bf16.mxu0 0
    %1748 = vmatpush1.bf16.msra.mxu0 0
    %1749 = vmatprep.subr.bf16.mxu0 0
    %1750 = vmatpush1.bf16.msra.mxu0 0
    %1751 = vmatprep.subr.bf16.mxu0 0
    %1752 = vmatpush1.bf16.msra.mxu0 0
    %1753 = vmatprep.subr.bf16.mxu0 0
    %1754 = vmatpush1.bf16.msra.mxu0 0
    %1755 = vmatprep.subr.bf16.mxu0 0
    %1756 = vmatpush1.bf16.msra.mxu0 0
    %1757 = vmatprep.subr.bf16.mxu0 0
    %1758 = vmatpush1.bf16.msra.mxu0 0
    %1759 = vmatprep.subr.bf16.mxu0 0
    %1760 = vmatpush1.bf16.msra.mxu0 0
    %1761 = vmatprep.subr.bf16.mxu0 0
    %1762 = vmatpush1.bf16.msra.mxu0 0
    %1763 = vmatprep.subr.bf16.mxu0 0
    %1764 = vmatpush1.bf16.msra.mxu0 0
    %1765 = vmatprep.subr.bf16.mxu0 0
    %1766 = vmatpush1.bf16.msra.mxu0 0
    %1767 = vmatprep.subr.bf16.mxu0 0
    %1768 = vmatpush1.bf16.msra.mxu0 0
    %1769 = vmatprep.subr.bf16.mxu0 0
    %1770 = vmatpush1.bf16.msra.mxu0 0
    %1771 = vmatprep.subr.bf16.mxu0 0
    %1772 = vmatpush1.bf16.msra.mxu0 0
    %1773 = vmatprep.subr.bf16.mxu0 0
    %1774 = vmatpush1.bf16.msra.mxu0 0
    %1775 = vmatprep.mubr.bf16.mxu0 0
    %1776 = vmatmul.mubr.bf16.gmra.mrb[0].mxu0 %v1738
    %v1777 = vpop.f32.mrb[0].mxu0
    %v1778 = vadd.f32 0.0, %v1777
    %v1779 = vpop.f32.mrb[0].mxu0
    %v1780 = vpop.f32.mrb[0].mxu0
    %v1781 = vadd.f32 0.0, %v1780
    %v1782 = vpop.f32.mrb[0].mxu0
    %1783 = vdwg.mxu0
    %v1784 = vadd.f32 %v1344, %v1778
    %v1785 = vadd.f32 %v1345, %v1781
    %v1786 = vld [vmem:[%s5] sm:$0x1]
    %v1788 = vlaneseq
    %v1789 = vshrl.u32 %v1788, 7
    %v1790 = vsub.s32 0, %v1789
    %v1791 = vrot.slane %v1786, %v1790
    %v1793 = vadd.f32 %v1784, %v1791
    %v1794 = vadd.f32 %v1785, %v1791
    %1795 = vst.msk [vmem:[#allocation2] sm:$0xff] %vm44, %v1793
    %1796 = vst.msk [vmem:[#allocation2 + $0x8] sm:$0xff] %vm44, %v1794
    // Predicated region
    $region26: #{tpu_custom_call.1} parent=1 // pred_check
      _
    $region27: #{tpu_custom_call.1} parent=1 // pred_check_branch
      %1798 = sbr.rel (0) target = $region29
    $region28: #{tpu_custom_call.1} parent=1 // pred_region
      %s1800 = ssub.s32 256, 256
      %1801 = vsyncadd [#allocation3], %s1800
      %s1802 = sshll.u32 [#allocation2], 4
      %s1803 = int_to_ptr.vmem [resolvable:$true] %s1802
      %1808 = dma.vmem_to_hbm [thread:$0]  %s1803, 256, %s6, [#allocation3], 128, 128, 8
    $region29: #{tpu_custom_call.1} parent=1 // pred_fallthru
      _
    // Predicated region
    $region30: #{tpu_custom_call.1} parent=1 // pred_check
      _
    $region31: #{tpu_custom_call.1} parent=1 // pred_check_branch
      %1810 = sbr.rel (0) target = $region33
    $region32: #{tpu_custom_call.1} parent=1 // pred_region
      %1811 = dma.done [#allocation3], 256
    $region33: #{tpu_custom_call.1} parent=1 // pred_fallthru
      _
    %1812 = vsyncpa [#allocation3], 1

</llo_original>
